<compile_context>
chip_gen: v7x
topology: tpu7x:2x2x1
jax: 0.10.0
libtpu: 0.0.40
codegen_flags: <defaults>
</compile_context>

<pallas_src>
import math
import functools

import numpy as np
import jax
import jax.numpy as jnp
from jax import lax
from jax.experimental import pallas as pl
from jax.experimental.pallas import tpu as pltpu


def _round_up(x, m):
    return ((x + m - 1) // m) * m


# ----------------------------------------------------------------------------
# Pallas kernel 1: AM_Decoder_Precompute (+ query-node part, + W_out-folded glimpse keys)
# fused into a single tiled matmul.
# ----------------------------------------------------------------------------
def _precompute_kernel(x_ref, w_ref, o_ref):
    o_ref[...] = jnp.dot(x_ref[...], w_ref[...], preferred_element_type=jnp.float32)


def precompute(graph_embed, w):
    """graph_embed: (B, P, E); w: (E, N) fused projection. Returns (B, P, N)."""
    B, P, E = graph_embed.shape
    N = w.shape[1]
    Np = _round_up(N, 128)           # lane-dense (unmasked vst) output
    M = B * P
    if M >= 512:
        tm = 512
    elif M >= 256:
        tm = 256
    else:
        tm = _round_up(M, 8)
    Mp = _round_up(M, tm)

    x = graph_embed.reshape(M, E)
    if Mp != M:
        x = jnp.pad(x, ((0, Mp - M), (0, 0)))
    if Np != N:
        w = jnp.pad(w, ((0, 0), (0, Np - N)))

    out = pl.pallas_call(
        _precompute_kernel,
        out_shape=jax.ShapeDtypeStruct((Mp, Np), jnp.float32),
        grid=(Mp // tm,),
        in_specs=[pl.BlockSpec((tm, E), lambda i: (i, 0)),
                  pl.BlockSpec((E, Np), lambda i: (0, 0))],   # weight block stays resident
        out_specs=pl.BlockSpec((tm, Np), lambda i: (i, 0)),
        compiler_params=pltpu.CompilerParams(dimension_semantics=("parallel",)),
    )(x, w)
    return out[:M, :N].reshape(B, P, N)


# ----------------------------------------------------------------------------
# Pallas kernel 2: full autoregressive decode for one batch block
# ----------------------------------------------------------------------------
def _decode_kernel(seed_ref, pk_ref, pv_ref, pgo_ref, pq_ref, avgq_ref, wqd_ref,
                   coordsT_ref, actions_ref, logp_ref, *,
                   n_heads, num_steps, clip_c, sample):
    Bt, P, E = pk_ref.shape
    V = actions_ref.shape[1]
    H = n_heads
    hd = E // H
    neg = jnp.float32(-1e9)
    inv_sqrt_hd = jnp.float32(1.0 / math.sqrt(hd))
    inv_sqrt_e = jnp.float32(1.0 / math.sqrt(E))
    clip = jnp.float32(clip_c)

    # Small loop-invariant values (hoisted out of the decode loop).
    avgq = avgq_ref[...]                 # (Bt, 1, E)  avg_graph_embed part of the query
    wqd = wqd_ref[...]                   # (1, 1, E)   distance-diff row of W_query
    coordsT = coordsT_ref[...]           # (Bt, 2, P)  node coordinates (lane dim = P)

    if sample:
        pltpu.prng_seed(seed_ref[0] + pl.program_id(0))

    p_iota = lax.broadcasted_iota(jnp.int32, (1, 1, P), 2).astype(jnp.float32)       # (1,1,P)
    v_iota = lax.broadcasted_iota(jnp.int32, (1, V, 1), 1).astype(jnp.float32)       # (1,V,1)
    flat_iota = v_iota * jnp.float32(P) + p_iota                                     # (1,V,P)
    col_iota = lax.broadcasted_iota(jnp.int32, (1, 1, P + 1), 2)                     # (1,1,P+1)

    # Initial state: every vehicle sits at node 0; only node 0 is masked.
    node0_oh = (p_iota == 0.0).astype(jnp.float32)                                   # (1,1,P)
    cust_oh0 = jnp.zeros((Bt, V, P), jnp.float32) + node0_oh                         # (Bt,V,P)
    selmask0 = cust_oh0                                                              # (Bt,V,P)
    cur_dist0 = jnp.zeros((Bt, V, 1), jnp.float32)
    acc_act0 = jnp.zeros((Bt, V, P + 1), jnp.float32)
    acc_lp0 = jnp.zeros((Bt, 1, 1), jnp.float32)

    def step(t, carry):
        cust_oh, selmask, cur_dist, acc_act, acc_lp = carry

        # ---- context / query (heads fused; avg part precomputed, node part gathered
        #      via one-hot contraction with the precomputed query projection) ----------
        dd = cur_dist - jnp.min(cur_dist, axis=1, keepdims=True)          # (Bt,V,1)
        q = lax.dot_general(cust_oh, pq_ref[...],                         # 'bvp,bpe->bve'
                            (((2,), (1,)), ((0,), (0,))),
                            preferred_element_type=jnp.float32)
        q = q + avgq + dd * wqd                                           # (Bt,V,E)

        bias = selmask * neg                                              # (Bt,V,P)

        # ---- multi-head glimpse attention; W_out folded into the glimpse keys --------
        score = jnp.zeros((Bt, V, P), jnp.float32)
        for h in range(H):
            lo = h * hd
            qh = q[:, :, lo:lo + hd]                                      # (Bt,V,hd)
            kh = pk_ref[:, :, lo:lo + hd]                                 # (Bt,P,hd)
            compat = lax.dot_general(qh, kh, (((2,), (2,)), ((0,), (0,))),
                                     preferred_element_type=jnp.float32)  # (Bt,V,P)
            compat = compat * inv_sqrt_hd + bias
            compat = compat - jnp.max(compat, axis=-1, keepdims=True)
            e = jnp.exp(compat)
            attn = e * pl.reciprocal(jnp.sum(e, axis=-1, keepdims=True), approx=True)
            vh = pv_ref[:, :, lo:lo + hd]                                 # (Bt,P,hd)
            ho = lax.dot_general(attn, vh, (((2,), (1,)), ((0,), (0,))),
                                 preferred_element_type=jnp.float32)      # (Bt,V,hd)
            goh = pgo_ref[:, :, lo:lo + hd]                               # (Bt,P,hd)
            score = score + lax.dot_general(ho, goh, (((2,), (2,)), ((0,), (0,))),
                                            preferred_element_type=jnp.float32)

        # ---- single-head score, tanh clipping, joint (vehicle x customer) log-softmax -
        logits = clip * jnp.tanh(score * inv_sqrt_e)
        logits = jnp.where(selmask > 0.5, neg, logits)
        m = jnp.max(jnp.max(logits, axis=2, keepdims=True), axis=1, keepdims=True)
        z = logits - m
        s = jnp.sum(jnp.sum(jnp.exp(z), axis=2, keepdims=True), axis=1, keepdims=True)
        logp = z - jnp.log(s)                                             # (Bt,V,P)

        # ---- greedy argmax / Gumbel-max sampling, all in-kernel ----------------------
        if sample:
            bits = pltpu.prng_random_bits((Bt, V, P))
            msk = jnp.array((1 << 24) - 1, dtype=bits.dtype)
            u = jnp.bitwise_and(bits, msk).astype(jnp.float32) * jnp.float32(1.0 / (1 << 24))
            u = jnp.clip(u, 1e-7, 1.0 - 1e-7)
            pert = logp + (-jnp.log(-jnp.log(u)))
        else:
            pert = logp
        best = jnp.max(jnp.max(pert, axis=2, keepdims=True), axis=1, keepdims=True)
        cand = jnp.where(pert == best, flat_iota, jnp.float32(V * P))
        flat = jnp.min(jnp.min(cand, axis=2, keepdims=True), axis=1, keepdims=True)  # (Bt,1,1)
        sel_oh = (flat_iota == flat).astype(jnp.float32)                  # (Bt,V,P)
        veh_oh = jnp.sum(sel_oh, axis=2, keepdims=True)                   # (Bt,V,1)
        cust_sel_oh = jnp.sum(sel_oh, axis=1, keepdims=True)              # (Bt,1,P)

        lp_sel = jnp.sum(jnp.sum(sel_oh * logp, axis=2, keepdims=True), axis=1, keepdims=True)
        acc_lp = acc_lp + lp_sel

        # ---- incremental open-path distance of the selected vehicle ------------------
        prev_oh = jnp.sum(veh_oh * cust_oh, axis=1, keepdims=True)        # (Bt,1,P)
        dxy = jnp.sum((cust_sel_oh - prev_oh) * coordsT, axis=2, keepdims=True)   # (Bt,2,1)
        leg = jnp.sqrt(jnp.sum(dxy * dxy, axis=1, keepdims=True))         # (Bt,1,1)
        cur_dist = cur_dist + veh_oh * leg

        # ---- state updates ------------------------------------------------------------
        cust_oh = veh_oh * cust_sel_oh + (1.0 - veh_oh) * cust_oh         # new current nodes
        selmask = jnp.maximum(selmask, cust_sel_oh)                       # mask chosen customer

        # actions column t (each column written exactly once -> accumulation == assignment)
        cur_idx = jnp.sum(cust_oh * p_iota, axis=2, keepdims=True)        # (Bt,V,1)
        col_oh = (col_iota == t).astype(jnp.float32)                      # (1,1,P+1)
        acc_act = acc_act + cur_idx * col_oh

        return cust_oh, selmask, cur_dist, acc_act, acc_lp

    carry = lax.fori_loop(1, num_steps + 1, step,
                          (cust_oh0, selmask0, cur_dist0, acc_act0, acc_lp0))
    _, _, _, acc_act, acc_lp = carry

    actions_ref[...] = acc_act.astype(jnp.int32)     # one dense store per block
    logp_ref[...] = acc_lp


def _pick_block_b(B):
    # Sublane-friendly batch blocks for large B; always >=2 grid steps when B is even
    # so the ("parallel",) axis can shard across v7x's two TensorCores.
    for cand in (16, 8):
        if B % cand == 0 and B // cand >= 2:
            return cand
    if B % 2 == 0 and B >= 2:
        return B // 2
    return B


def decode(seed_arr, pk, pv, pgo, pq, avg_q, wqd3, coordsT, *, vehicle_num, n_heads,
           sample, clip_c=10.0):
    B, P, E = pk.shape
    V = vehicle_num
    Bt = _pick_block_b(B)
    nb = B // Bt

    kernel = functools.partial(_decode_kernel, n_heads=n_heads, num_steps=P - 1,
                               clip_c=clip_c, sample=sample)
    grid_spec = pltpu.PrefetchScalarGridSpec(
        num_scalar_prefetch=1,
        grid=(nb,),
        in_specs=[
            pl.BlockSpec((Bt, P, E), lambda i, s: (i, 0, 0)),   # proj_key
            pl.BlockSpec((Bt, P, E), lambda i, s: (i, 0, 0)),   # proj_val
            pl.BlockSpec((Bt, P, E), lambda i, s: (i, 0, 0)),   # glimpse keys @ W_out^T
            pl.BlockSpec((Bt, P, E), lambda i, s: (i, 0, 0)),   # node part of query proj
            pl.BlockSpec((Bt, 1, E), lambda i, s: (i, 0, 0)),   # avg-graph part of query
            pl.BlockSpec((1, 1, E), lambda i, s: (0, 0, 0)),    # dist row of W_query
            pl.BlockSpec((Bt, 2, P), lambda i, s: (i, 0, 0)),   # node coords (lane = P)
        ],
        out_specs=(
            pl.BlockSpec((Bt, V, P + 1), lambda i, s: (i, 0, 0)),
            pl.BlockSpec((Bt, 1, 1), lambda i, s: (i, 0, 0)),
        ),
    )
    return pl.pallas_call(
        kernel,
        out_shape=(jax.ShapeDtypeStruct((B, V, P + 1), jnp.int32),
                   jax.ShapeDtypeStruct((B, 1, 1), jnp.float32)),
        grid_spec=grid_spec,
        compiler_params=pltpu.CompilerParams(
            dimension_semantics=("parallel",),
            vmem_limit_bytes=48 * 1024 * 1024),   # explicit; fits v5e/v6e/v7x
    )(seed_arr, pk, pv, pgo, pq, avg_q, wqd3, coordsT)


# ----------------------------------------------------------------------------
# Parameters and full forward (mirrors the PyTorch module)
# ----------------------------------------------------------------------------
def init_params(key, E, H, hd, Dc):
    # init_parameters(): uniform(-1/sqrt(last_dim), 1/sqrt(last_dim)) per parameter
    ks = jax.random.split(key, 5)

    def u(k, shape, last):
        s = 1.0 / math.sqrt(last)
        return jax.random.uniform(k, shape, jnp.float32, -s, s)

    return {
        'enc_key_proj': u(ks[0], (E, E), E),
        'enc_val_proj': u(ks[1], (E, E), E),
        'enc_key_for_glimpse_proj': u(ks[2], (E, E), E),
        'W_query': u(ks[3], (H, Dc, hd), hd),   # decoder.first_MHA.W_query
        'W_out': u(ks[4], (H, hd, E), E),       # decoder.first_MHA.W_out
    }


@functools.partial(jax.jit, static_argnames=("vehicle_num", "decoder_type", "n_heads_dec"))
def am_tsp_2d_limitveh_actor(params, problems, graph_embed, avg_graph_embed, *,
                             vehicle_num, decoder_type='sample', n_heads_dec=4, seed=0):
    B, P, _ = problems.shape
    E = graph_embed.shape[-1]
    V = vehicle_num
    H = n_heads_dec

    # Fuse the per-head decoder weights (standard MHA concat-of-heads algebra).
    Dc = 2 * E + 1
    wq_fused = jnp.transpose(params['W_query'], (1, 0, 2)).reshape(Dc, E)
    wq_avg, wq_cur, wq_dist = wq_fused[:E], wq_fused[E:2 * E], wq_fused[2 * E:2 * E + 1]
    wo_fused = params['W_out'].reshape(E, E)
    # Fold W_out into the glimpse-key projection:
    #   score = (heads @ W_out) @ (GE @ Wg)^T  ==  heads @ (GE @ (Wg @ W_out^T))^T
    wgo = jnp.dot(params['enc_key_for_glimpse_proj'], wo_fused.T)

    # One fused (B*P, E) x (E, 4E) projection: keys, values, W_out-folded glimpse keys,
    # and the per-node part of the query projection (cur_node_embed @ Wq_cur).
    w4 = jnp.concatenate(
        [params['enc_key_proj'], params['enc_val_proj'], wgo, wq_cur], axis=1)
    proj = precompute(graph_embed, w4)                         # (B, P, 4E)
    pk = proj[..., 0 * E:1 * E]
    pv = proj[..., 1 * E:2 * E]
    pgo = proj[..., 2 * E:3 * E]
    pq = proj[..., 3 * E:4 * E]

    avg_q = jnp.dot(avg_graph_embed, wq_avg)[:, None, :]       # (B, 1, E), loop-invariant
    wqd3 = wq_dist.reshape(1, 1, E)
    coordsT = jnp.transpose(problems[:, :, :2], (0, 2, 1))     # (B, 2, P)
    seed_arr = jnp.reshape(jnp.asarray(seed, jnp.int32), (1,))

    # The torch `while True` loop runs exactly problem_size-1 iterations for this module
    # (every not-done element assigns exactly one new nonzero customer per step, all
    # elements finish simultaneously), so the whole decode is one fixed-trip-count kernel.
    actions, logp = decode(seed_arr, pk, pv, pgo, pq, avg_q, wqd3, coordsT,
                           vehicle_num=V, n_heads=H,
                           sample=(decoder_type == 'sample'))
    return actions, logp.reshape(B), None


if __name__ == "__main__":
    B, P, E, V = 2, 8, 32, 3     # batch, problem_size, embedding_dim, vehicle_num
    H_dec = 4                    # n_heads_dec  (hidden_dim = 8)
    hd = E // H_dec
    Dc = 2 * E + 1               # decoder context dim (embedding_dim*2 + 1)

    key = jax.random.PRNGKey(0)
    k_prob, k_embed, k_param = jax.random.split(key, 3)
    problems = jax.random.uniform(k_prob, (B, P, 2), jnp.float32)      # TSP 2D coords
    graph_embed = jax.random.normal(k_embed, (B, P, E), jnp.float32)
    avg_graph_embed = graph_embed.mean(axis=1)
    params = init_params(k_param, E, H_dec, hd, Dc)

    actions, log_probs, _ = am_tsp_2d_limitveh_actor(
        params, problems, graph_embed, avg_graph_embed,
        vehicle_num=V, decoder_type='greedy', n_heads_dec=H_dec)
    jax.block_until_ready((actions, log_probs))

    assert actions.shape == (B, V, P + 1)
    assert log_probs.shape == (B,)
    assert bool(jnp.all(jnp.isfinite(log_probs)))
    acts = np.asarray(actions)
    # sanity: first/last columns are the depot, and every customer 1..P-1 is visited.
    assert np.all(acts[:, :, 0] == 0) and np.all(acts[:, :, -1] == 0)
    for b in range(B):
        assert set(np.unique(acts[b]).tolist()) == set(range(P))
    print("KERNEL_OK")
</pallas_src>

<mosaic_0001>
module attributes {stable_mosaic.version = 11 : i64} {
  func.func @_precompute_kernel(%arg0: i32, %arg1: memref<16x32xf32, #tpu.memory_space<vmem>>, %arg2: memref<32x128xf32, #tpu.memory_space<vmem>>, %arg3: memref<16x128xf32, #tpu.memory_space<vmem>>) attributes {dimension_semantics = [#tpu.dimension_semantics<parallel>], iteration_bounds = array<i64: 1>, scalar_prefetch = 0 : i64, scratch_operands = 0 : i64, tpu.core_type = #tpu.core_type<tc>, window_params = [{transform_indices = @transform_0, window_bounds = array<i64: 16, 32>}, {pipeline_mode = #tpu.pipeline_mode<synchronous>, transform_indices = @transform_1, window_bounds = array<i64: 32, 128>}, {transform_indices = @transform_2, window_bounds = array<i64: 16, 128>}]} {
    %c0 = arith.constant 0 : index
    %c0_0 = arith.constant 0 : index
    %0 = vector.load %arg1[%c0, %c0_0] : memref<16x32xf32, #tpu.memory_space<vmem>>, vector<16x32xf32>
    %c0_1 = arith.constant 0 : index
    %c0_2 = arith.constant 0 : index
    %1 = vector.load %arg2[%c0_1, %c0_2] : memref<32x128xf32, #tpu.memory_space<vmem>>, vector<32x128xf32>
    %cst = arith.constant dense<0.000000e+00> : vector<16x128xf32>
    %2 = tpu.matmul %0, %1, %cst {dimension_numbers = #tpu.dot_dimension_numbers<[1], [0], [0], [1], [0, 0, 1, 1], [], []>} : vector<16x32xf32>, vector<32x128xf32>, vector<16x128xf32> -> vector<16x128xf32>
    %c0_3 = arith.constant 0 : index
    %c0_4 = arith.constant 0 : index
    %3 = vector.load %arg3[%c0_3, %c0_4] : memref<16x128xf32, #tpu.memory_space<vmem>>, vector<16x128xf32>
    tpu.vector_store %arg3[%c0_3, %c0_4], %2 {strides = array<i32>} : memref<16x128xf32, #tpu.memory_space<vmem>>, vector<16x128xf32>,
    return
  }
  func.func @transform_0(%arg0: i32) -> (i32, i32) {
    %c0_i32 = arith.constant 0 : i32
    %c0_i32_0 = arith.constant 0 : i32
    return %arg0, %c0_i32 : i32, i32
  }
  func.func @transform_1(%arg0: i32) -> (i32, i32) {
    %c0_i32 = arith.constant 0 : i32
    %c0_i32_0 = arith.constant 0 : i32
    %c0_i32_1 = arith.constant 0 : i32
    return %c0_i32, %c0_i32_0 : i32, i32
  }
  func.func @transform_2(%arg0: i32) -> (i32, i32) {
    %c0_i32 = arith.constant 0 : i32
    %c0_i32_0 = arith.constant 0 : i32
    return %arg0, %c0_i32 : i32, i32
  }
}

module attributes {stable_mosaic.version = 11 : i64} {
  func.func @_decode_kernel(%arg0: i32, %arg1: memref<1xi32, #tpu.memory_space<smem>>, %arg2: memref<1x8x32xf32, #tpu.memory_space<vmem>>, %arg3: memref<1x8x32xf32, #tpu.memory_space<vmem>>, %arg4: memref<1x8x32xf32, #tpu.memory_space<vmem>>, %arg5: memref<1x8x32xf32, #tpu.memory_space<vmem>>, %arg6: memref<1x1x32xf32, #tpu.memory_space<vmem>>, %arg7: memref<1x1x32xf32, #tpu.memory_space<vmem>>, %arg8: memref<1x2x8xf32, #tpu.memory_space<vmem>>, %arg9: memref<1x3x9xi32, #tpu.memory_space<vmem>>, %arg10: memref<1x1x1xf32, #tpu.memory_space<vmem>>) attributes {dimension_semantics = [#tpu.dimension_semantics<parallel>], iteration_bounds = array<i64: 2>, scalar_prefetch = 1 : i64, scratch_operands = 0 : i64, tpu.core_type = #tpu.core_type<tc>, window_params = [{transform_indices = @transform_0, window_bounds = array<i64: 1, 8, 32>}, {transform_indices = @transform_1, window_bounds = array<i64: 1, 8, 32>}, {transform_indices = @transform_2, window_bounds = array<i64: 1, 8, 32>}, {transform_indices = @transform_3, window_bounds = array<i64: 1, 8, 32>}, {transform_indices = @transform_4, window_bounds = array<i64: 1, 1, 32>}, {pipeline_mode = #tpu.pipeline_mode<synchronous>, transform_indices = @transform_5, window_bounds = array<i64: 1, 1, 32>}, {transform_indices = @transform_6, window_bounds = array<i64: 1, 2, 8>}, {transform_indices = @transform_7, window_bounds = array<i64: 1, 3, 9>}, {transform_indices = @transform_8, window_bounds = array<i64: 1, 1, 1>}]} {
    %c0 = arith.constant 0 : index
    %c0_0 = arith.constant 0 : index
    %c0_1 = arith.constant 0 : index
    %0 = vector.load %arg6[%c0, %c0_0, %c0_1] : memref<1x1x32xf32, #tpu.memory_space<vmem>>, vector<1x1x32xf32>
    %c0_2 = arith.constant 0 : index
    %c0_3 = arith.constant 0 : index
    %c0_4 = arith.constant 0 : index
    %1 = vector.load %arg7[%c0_2, %c0_3, %c0_4] : memref<1x1x32xf32, #tpu.memory_space<vmem>>, vector<1x1x32xf32>
    %c0_5 = arith.constant 0 : index
    %c0_6 = arith.constant 0 : index
    %c0_7 = arith.constant 0 : index
    %2 = vector.load %arg8[%c0_5, %c0_6, %c0_7] : memref<1x2x8xf32, #tpu.memory_space<vmem>>, vector<1x2x8xf32>
    %3 = tpu.iota {dimensions = array<i32: 2>} : vector<1x1x8xi32>
    %4 = arith.sitofp %3 : vector<1x1x8xi32> to vector<1x1x8xf32>
    %5 = tpu.iota {dimensions = array<i32: 1>} : vector<1x3x1xi32>
    %6 = arith.sitofp %5 : vector<1x3x1xi32> to vector<1x3x1xf32>
    %cst = arith.constant 8.000000e+00 : f32
    %7 = vector.broadcast %cst : f32 to vector<1x3x1xf32>
    %8 = arith.mulf %6, %7 : vector<1x3x1xf32>
    %9 = vector.broadcast %8 : vector<1x3x1xf32> to vector<1x3x8xf32>
    %10 = vector.broadcast %4 : vector<1x1x8xf32> to vector<1x3x8xf32>
    %11 = arith.addf %9, %10 : vector<1x3x8xf32>
    %12 = tpu.iota {dimensions = array<i32: 2>} : vector<1x1x9xi32>
    %cst_8 = arith.constant 0.000000e+00 : f32
    %13 = vector.broadcast %cst_8 : f32 to vector<1x1x8xf32>
    %14 = arith.cmpf oeq, %4, %13 : vector<1x1x8xf32>
    %15 = arith.extui %14 : vector<1x1x8xi1> to vector<1x1x8xi32>
    %16 = arith.sitofp %15 : vector<1x1x8xi32> to vector<1x1x8xf32>
    %cst_9 = arith.constant 0.000000e+00 : f32
    %17 = vector.broadcast %cst_9 : f32 to vector<1x3x8xf32>
    %18 = vector.broadcast %16 : vector<1x1x8xf32> to vector<1x3x8xf32>
    %19 = arith.addf %17, %18 : vector<1x3x8xf32>
    %cst_10 = arith.constant 0.000000e+00 : f32
    %20 = vector.broadcast %cst_10 : f32 to vector<1x3x1xf32>
    %cst_11 = arith.constant 0.000000e+00 : f32
    %21 = vector.broadcast %cst_11 : f32 to vector<1x3x9xf32>
    %cst_12 = arith.constant 0.000000e+00 : f32
    %22 = vector.broadcast %cst_12 : f32 to vector<1x1x1xf32>
    %cst_13 = arith.constant -1.000000e+09 : f32
    %cst_14 = arith.constant 0.353553385 : f32
    %cst_15 = arith.constant 0.176776692 : f32
    %cst_16 = arith.constant 1.000000e+01 : f32
    %c1_i32 = arith.constant 1 : i32
    %c7_i32 = arith.constant 7 : i32
    %23 = arith.addi %c1_i32, %c7_i32 : i32
    %c1_i32_17 = arith.constant 1 : i32
    %24:5 = scf.for %arg11 = %c1_i32 to %23 step %c1_i32_17 iter_args(%arg12 = %19, %arg13 = %19, %arg14 = %20, %arg15 = %21, %arg16 = %22) -> (vector<1x3x8xf32>, vector<1x3x8xf32>, vector<1x3x1xf32>, vector<1x3x9xf32>, vector<1x1x1xf32>)  : i32 {
      %cst_25 = arith.constant dense<0x7F800000> : vector<1x1xf32>
      %28 = vector.multi_reduction <minimumf>, %arg14, %cst_25 [1] : vector<1x3x1xf32> to vector<1x1xf32>
      %29 = vector.shape_cast %28 : vector<1x1xf32> to vector<1x1x1xf32>
      %30 = vector.broadcast %29 : vector<1x1x1xf32> to vector<1x3x1xf32>
      %31 = arith.subf %arg14, %30 : vector<1x3x1xf32>
      %c0_26 = arith.constant 0 : index
      %c0_27 = arith.constant 0 : index
      %c0_28 = arith.constant 0 : index
      %32 = vector.load %arg5[%c0_26, %c0_27, %c0_28] : memref<1x8x32xf32, #tpu.memory_space<vmem>>, vector<1x8x32xf32>
      %cst_29 = arith.constant dense<0.000000e+00> : vector<1x3x32xf32>
      %33 = tpu.matmul %arg12, %32, %cst_29 {dimension_numbers = #tpu.dot_dimension_numbers<[2], [1], [1], [2], [0, 0, 0, 1, 1, 2], [0], [0]>} : vector<1x3x8xf32>, vector<1x8x32xf32>, vector<1x3x32xf32> -> vector<1x3x32xf32>
      %34 = vector.broadcast %0 : vector<1x1x32xf32> to vector<1x3x32xf32>
      %35 = arith.addf %33, %34 : vector<1x3x32xf32>
      %36 = vector.broadcast %31 : vector<1x3x1xf32> to vector<1x3x32xf32>
      %37 = vector.broadcast %1 : vector<1x1x32xf32> to vector<1x3x32xf32>
      %38 = arith.mulf %36, %37 : vector<1x3x32xf32>
      %39 = arith.addf %35, %38 : vector<1x3x32xf32>
      %40 = vector.broadcast %cst_13 : f32 to vector<1x3x8xf32>
      %41 = arith.mulf %arg13, %40 : vector<1x3x8xf32>
      %cst_30 = arith.constant 0.000000e+00 : f32
      %42 = vector.broadcast %cst_30 : f32 to vector<1x3x8xf32>
      %43 = vector.extract_strided_slice %39 {offsets = [0, 0, 0], sizes = [1, 3, 8], strides = [1, 1, 1]} : vector<1x3x32xf32> to vector<1x3x8xf32>
      %c0_31 = arith.constant 0 : index
      %c0_32 = arith.constant 0 : index
      %c0_33 = arith.constant 0 : index
      %44 = vector.load %arg2[%c0_31, %c0_32, %c0_33] : memref<1x8x32xf32, #tpu.memory_space<vmem>>, vector<1x8x8xf32>
      %cst_34 = arith.constant dense<0.000000e+00> : vector<1x3x8xf32>
      %45 = tpu.matmul %43, %44, %cst_34 {dimension_numbers = #tpu.dot_dimension_numbers<[2], [2], [1], [1], [0, 0, 0, 1, 1, 1], [0], [0]>} : vector<1x3x8xf32>, vector<1x8x8xf32>, vector<1x3x8xf32> -> vector<1x3x8xf32>
      %46 = vector.broadcast %cst_14 : f32 to vector<1x3x8xf32>
      %47 = arith.mulf %45, %46 : vector<1x3x8xf32>
      %48 = arith.addf %47, %41 : vector<1x3x8xf32>
      %cst_35 = arith.constant dense<0xFF800000> : vector<1x3xf32>
      %49 = vector.multi_reduction <maximumf>, %48, %cst_35 [2] : vector<1x3x8xf32> to vector<1x3xf32>
      %50 = vector.shape_cast %49 : vector<1x3xf32> to vector<1x3x1xf32>
      %51 = vector.broadcast %50 : vector<1x3x1xf32> to vector<1x3x8xf32>
      %52 = arith.subf %48, %51 : vector<1x3x8xf32>
      %53 = math.exp %52 : vector<1x3x8xf32>
      %cst_36 = arith.constant dense<0.000000e+00> : vector<1x3xf32>
      %54 = vector.multi_reduction <add>, %53, %cst_36 [2] : vector<1x3x8xf32> to vector<1x3xf32>
      %55 = vector.shape_cast %54 : vector<1x3xf32> to vector<1x3x1xf32>
      %56 = tpu.reciprocal %55 {approx = true} : vector<1x3x1xf32> -> vector<1x3x1xf32>
      %57 = vector.broadcast %56 : vector<1x3x1xf32> to vector<1x3x8xf32>
      %58 = arith.mulf %53, %57 : vector<1x3x8xf32>
      %c0_37 = arith.constant 0 : index
      %c0_38 = arith.constant 0 : index
      %c0_39 = arith.constant 0 : index
      %59 = vector.load %arg3[%c0_37, %c0_38, %c0_39] : memref<1x8x32xf32, #tpu.memory_space<vmem>>, vector<1x8x8xf32>
      %cst_40 = arith.constant dense<0.000000e+00> : vector<1x3x8xf32>
      %60 = tpu.matmul %58, %59, %cst_40 {dimension_numbers = #tpu.dot_dimension_numbers<[2], [1], [1], [2], [0, 0, 0, 1, 1, 2], [0], [0]>} : vector<1x3x8xf32>, vector<1x8x8xf32>, vector<1x3x8xf32> -> vector<1x3x8xf32>
      %c0_41 = arith.constant 0 : index
      %c0_42 = arith.constant 0 : index
      %c0_43 = arith.constant 0 : index
      %61 = vector.load %arg4[%c0_41, %c0_42, %c0_43] : memref<1x8x32xf32, #tpu.memory_space<vmem>>, vector<1x8x8xf32>
      %cst_44 = arith.constant dense<0.000000e+00> : vector<1x3x8xf32>
      %62 = tpu.matmul %60, %61, %cst_44 {dimension_numbers = #tpu.dot_dimension_numbers<[2], [2], [1], [1], [0, 0, 0, 1, 1, 1], [0], [0]>} : vector<1x3x8xf32>, vector<1x8x8xf32>, vector<1x3x8xf32> -> vector<1x3x8xf32>
      %63 = arith.addf %42, %62 : vector<1x3x8xf32>
      %64 = vector.extract_strided_slice %39 {offsets = [0, 0, 8], sizes = [1, 3, 8], strides = [1, 1, 1]} : vector<1x3x32xf32> to vector<1x3x8xf32>
      %c0_45 = arith.constant 0 : index
      %c0_46 = arith.constant 0 : index
      %c8 = arith.constant 8 : index
      %65 = vector.load %arg2[%c0_45, %c0_46, %c8] : memref<1x8x32xf32, #tpu.memory_space<vmem>>, vector<1x8x8xf32>
      %cst_47 = arith.constant dense<0.000000e+00> : vector<1x3x8xf32>
      %66 = tpu.matmul %64, %65, %cst_47 {dimension_numbers = #tpu.dot_dimension_numbers<[2], [2], [1], [1], [0, 0, 0, 1, 1, 1], [0], [0]>} : vector<1x3x8xf32>, vector<1x8x8xf32>, vector<1x3x8xf32> -> vector<1x3x8xf32>
      %67 = vector.broadcast %cst_14 : f32 to vector<1x3x8xf32>
      %68 = arith.mulf %66, %67 : vector<1x3x8xf32>
      %69 = arith.addf %68, %41 : vector<1x3x8xf32>
      %cst_48 = arith.constant dense<0xFF800000> : vector<1x3xf32>
      %70 = vector.multi_reduction <maximumf>, %69, %cst_48 [2] : vector<1x3x8xf32> to vector<1x3xf32>
      %71 = vector.shape_cast %70 : vector<1x3xf32> to vector<1x3x1xf32>
      %72 = vector.broadcast %71 : vector<1x3x1xf32> to vector<1x3x8xf32>
      %73 = arith.subf %69, %72 : vector<1x3x8xf32>
      %74 = math.exp %73 : vector<1x3x8xf32>
      %cst_49 = arith.constant dense<0.000000e+00> : vector<1x3xf32>
      %75 = vector.multi_reduction <add>, %74, %cst_49 [2] : vector<1x3x8xf32> to vector<1x3xf32>
      %76 = vector.shape_cast %75 : vector<1x3xf32> to vector<1x3x1xf32>
      %77 = tpu.reciprocal %76 {approx = true} : vector<1x3x1xf32> -> vector<1x3x1xf32>
      %78 = vector.broadcast %77 : vector<1x3x1xf32> to vector<1x3x8xf32>
      %79 = arith.mulf %74, %78 : vector<1x3x8xf32>
      %c0_50 = arith.constant 0 : index
      %c0_51 = arith.constant 0 : index
      %c8_52 = arith.constant 8 : index
      %80 = vector.load %arg3[%c0_50, %c0_51, %c8_52] : memref<1x8x32xf32, #tpu.memory_space<vmem>>, vector<1x8x8xf32>
      %cst_53 = arith.constant dense<0.000000e+00> : vector<1x3x8xf32>
      %81 = tpu.matmul %79, %80, %cst_53 {dimension_numbers = #tpu.dot_dimension_numbers<[2], [1], [1], [2], [0, 0, 0, 1, 1, 2], [0], [0]>} : vector<1x3x8xf32>, vector<1x8x8xf32>, vector<1x3x8xf32> -> vector<1x3x8xf32>
      %c0_54 = arith.constant 0 : index
      %c0_55 = arith.constant 0 : index
      %c8_56 = arith.constant 8 : index
      %82 = vector.load %arg4[%c0_54, %c0_55, %c8_56] : memref<1x8x32xf32, #tpu.memory_space<vmem>>, vector<1x8x8xf32>
      %cst_57 = arith.constant dense<0.000000e+00> : vector<1x3x8xf32>
      %83 = tpu.matmul %81, %82, %cst_57 {dimension_numbers = #tpu.dot_dimension_numbers<[2], [2], [1], [1], [0, 0, 0, 1, 1, 1], [0], [0]>} : vector<1x3x8xf32>, vector<1x8x8xf32>, vector<1x3x8xf32> -> vector<1x3x8xf32>
      %84 = arith.addf %63, %83 : vector<1x3x8xf32>
      %85 = vector.extract_strided_slice %39 {offsets = [0, 0, 16], sizes = [1, 3, 8], strides = [1, 1, 1]} : vector<1x3x32xf32> to vector<1x3x8xf32>
      %c0_58 = arith.constant 0 : index
      %c0_59 = arith.constant 0 : index
      %c16 = arith.constant 16 : index
      %86 = vector.load %arg2[%c0_58, %c0_59, %c16] : memref<1x8x32xf32, #tpu.memory_space<vmem>>, vector<1x8x8xf32>
      %cst_60 = arith.constant dense<0.000000e+00> : vector<1x3x8xf32>
      %87 = tpu.matmul %85, %86, %cst_60 {dimension_numbers = #tpu.dot_dimension_numbers<[2], [2], [1], [1], [0, 0, 0, 1, 1, 1], [0], [0]>} : vector<1x3x8xf32>, vector<1x8x8xf32>, vector<1x3x8xf32> -> vector<1x3x8xf32>
      %88 = vector.broadcast %cst_14 : f32 to vector<1x3x8xf32>
      %89 = arith.mulf %87, %88 : vector<1x3x8xf32>
      %90 = arith.addf %89, %41 : vector<1x3x8xf32>
      %cst_61 = arith.constant dense<0xFF800000> : vector<1x3xf32>
      %91 = vector.multi_reduction <maximumf>, %90, %cst_61 [2] : vector<1x3x8xf32> to vector<1x3xf32>
      %92 = vector.shape_cast %91 : vector<1x3xf32> to vector<1x3x1xf32>
      %93 = vector.broadcast %92 : vector<1x3x1xf32> to vector<1x3x8xf32>
      %94 = arith.subf %90, %93 : vector<1x3x8xf32>
      %95 = math.exp %94 : vector<1x3x8xf32>
      %cst_62 = arith.constant dense<0.000000e+00> : vector<1x3xf32>
      %96 = vector.multi_reduction <add>, %95, %cst_62 [2] : vector<1x3x8xf32> to vector<1x3xf32>
      %97 = vector.shape_cast %96 : vector<1x3xf32> to vector<1x3x1xf32>
      %98 = tpu.reciprocal %97 {approx = true} : vector<1x3x1xf32> -> vector<1x3x1xf32>
      %99 = vector.broadcast %98 : vector<1x3x1xf32> to vector<1x3x8xf32>
      %100 = arith.mulf %95, %99 : vector<1x3x8xf32>
      %c0_63 = arith.constant 0 : index
      %c0_64 = arith.constant 0 : index
      %c16_65 = arith.constant 16 : index
      %101 = vector.load %arg3[%c0_63, %c0_64, %c16_65] : memref<1x8x32xf32, #tpu.memory_space<vmem>>, vector<1x8x8xf32>
      %cst_66 = arith.constant dense<0.000000e+00> : vector<1x3x8xf32>
      %102 = tpu.matmul %100, %101, %cst_66 {dimension_numbers = #tpu.dot_dimension_numbers<[2], [1], [1], [2], [0, 0, 0, 1, 1, 2], [0], [0]>} : vector<1x3x8xf32>, vector<1x8x8xf32>, vector<1x3x8xf32> -> vector<1x3x8xf32>
      %c0_67 = arith.constant 0 : index
      %c0_68 = arith.constant 0 : index
      %c16_69 = arith.constant 16 : index
      %103 = vector.load %arg4[%c0_67, %c0_68, %c16_69] : memref<1x8x32xf32, #tpu.memory_space<vmem>>, vector<1x8x8xf32>
      %cst_70 = arith.constant dense<0.000000e+00> : vector<1x3x8xf32>
      %104 = tpu.matmul %102, %103, %cst_70 {dimension_numbers = #tpu.dot_dimension_numbers<[2], [2], [1], [1], [0, 0, 0, 1, 1, 1], [0], [0]>} : vector<1x3x8xf32>, vector<1x8x8xf32>, vector<1x3x8xf32> -> vector<1x3x8xf32>
      %105 = arith.addf %84, %104 : vector<1x3x8xf32>
      %106 = vector.extract_strided_slice %39 {offsets = [0, 0, 24], sizes = [1, 3, 8], strides = [1, 1, 1]} : vector<1x3x32xf32> to vector<1x3x8xf32>
      %c0_71 = arith.constant 0 : index
      %c0_72 = arith.constant 0 : index
      %c24 = arith.constant 24 : index
      %107 = vector.load %arg2[%c0_71, %c0_72, %c24] : memref<1x8x32xf32, #tpu.memory_space<vmem>>, vector<1x8x8xf32>
      %cst_73 = arith.constant dense<0.000000e+00> : vector<1x3x8xf32>
      %108 = tpu.matmul %106, %107, %cst_73 {dimension_numbers = #tpu.dot_dimension_numbers<[2], [2], [1], [1], [0, 0, 0, 1, 1, 1], [0], [0]>} : vector<1x3x8xf32>, vector<1x8x8xf32>, vector<1x3x8xf32> -> vector<1x3x8xf32>
      %109 = vector.broadcast %cst_14 : f32 to vector<1x3x8xf32>
      %110 = arith.mulf %108, %109 : vector<1x3x8xf32>
      %111 = arith.addf %110, %41 : vector<1x3x8xf32>
      %cst_74 = arith.constant dense<0xFF800000> : vector<1x3xf32>
      %112 = vector.multi_reduction <maximumf>, %111, %cst_74 [2] : vector<1x3x8xf32> to vector<1x3xf32>
      %113 = vector.shape_cast %112 : vector<1x3xf32> to vector<1x3x1xf32>
      %114 = vector.broadcast %113 : vector<1x3x1xf32> to vector<1x3x8xf32>
      %115 = arith.subf %111, %114 : vector<1x3x8xf32>
      %116 = math.exp %115 : vector<1x3x8xf32>
      %cst_75 = arith.constant dense<0.000000e+00> : vector<1x3xf32>
      %117 = vector.multi_reduction <add>, %116, %cst_75 [2] : vector<1x3x8xf32> to vector<1x3xf32>
      %118 = vector.shape_cast %117 : vector<1x3xf32> to vector<1x3x1xf32>
      %119 = tpu.reciprocal %118 {approx = true} : vector<1x3x1xf32> -> vector<1x3x1xf32>
      %120 = vector.broadcast %119 : vector<1x3x1xf32> to vector<1x3x8xf32>
      %121 = arith.mulf %116, %120 : vector<1x3x8xf32>
      %c0_76 = arith.constant 0 : index
      %c0_77 = arith.constant 0 : index
      %c24_78 = arith.constant 24 : index
      %122 = vector.load %arg3[%c0_76, %c0_77, %c24_78] : memref<1x8x32xf32, #tpu.memory_space<vmem>>, vector<1x8x8xf32>
      %cst_79 = arith.constant dense<0.000000e+00> : vector<1x3x8xf32>
      %123 = tpu.matmul %121, %122, %cst_79 {dimension_numbers = #tpu.dot_dimension_numbers<[2], [1], [1], [2], [0, 0, 0, 1, 1, 2], [0], [0]>} : vector<1x3x8xf32>, vector<1x8x8xf32>, vector<1x3x8xf32> -> vector<1x3x8xf32>
      %c0_80 = arith.constant 0 : index
      %c0_81 = arith.constant 0 : index
      %c24_82 = arith.constant 24 : index
      %124 = vector.load %arg4[%c0_80, %c0_81, %c24_82] : memref<1x8x32xf32, #tpu.memory_space<vmem>>, vector<1x8x8xf32>
      %cst_83 = arith.constant dense<0.000000e+00> : vector<1x3x8xf32>
      %125 = tpu.matmul %123, %124, %cst_83 {dimension_numbers = #tpu.dot_dimension_numbers<[2], [2], [1], [1], [0, 0, 0, 1, 1, 1], [0], [0]>} : vector<1x3x8xf32>, vector<1x8x8xf32>, vector<1x3x8xf32> -> vector<1x3x8xf32>
      %126 = arith.addf %105, %125 : vector<1x3x8xf32>
      %127 = vector.broadcast %cst_15 : f32 to vector<1x3x8xf32>
      %128 = arith.mulf %126, %127 : vector<1x3x8xf32>
      %129 = math.tanh %128 : vector<1x3x8xf32>
      %130 = vector.broadcast %cst_16 : f32 to vector<1x3x8xf32>
      %131 = arith.mulf %130, %129 : vector<1x3x8xf32>
      %cst_84 = arith.constant 5.000000e-01 : f32
      %132 = vector.broadcast %cst_84 : f32 to vector<1x3x8xf32>
      %133 = arith.cmpf ogt, %arg13, %132 : vector<1x3x8xf32>
      %134 = vector.broadcast %cst_13 : f32 to vector<1x3x8xf32>
      %135 = arith.select %133, %134, %131 : vector<1x3x8xi1>, vector<1x3x8xf32>
      %cst_85 = arith.constant dense<0xFF800000> : vector<1x3xf32>
      %136 = vector.multi_reduction <maximumf>, %135, %cst_85 [2] : vector<1x3x8xf32> to vector<1x3xf32>
      %137 = vector.shape_cast %136 : vector<1x3xf32> to vector<1x3x1xf32>
      %cst_86 = arith.constant dense<0xFF800000> : vector<1x1xf32>
      %138 = vector.multi_reduction <maximumf>, %137, %cst_86 [1] : vector<1x3x1xf32> to vector<1x1xf32>
      %139 = vector.shape_cast %138 : vector<1x1xf32> to vector<1x1x1xf32>
      %140 = vector.broadcast %139 : vector<1x1x1xf32> to vector<1x3x8xf32>
      %141 = arith.subf %135, %140 : vector<1x3x8xf32>
      %142 = math.exp %141 : vector<1x3x8xf32>
      %cst_87 = arith.constant dense<0.000000e+00> : vector<1x3xf32>
      %143 = vector.multi_reduction <add>, %142, %cst_87 [2] : vector<1x3x8xf32> to vector<1x3xf32>
      %144 = vector.shape_cast %143 : vector<1x3xf32> to vector<1x3x1xf32>
      %cst_88 = arith.constant dense<0.000000e+00> : vector<1x1xf32>
      %145 = vector.multi_reduction <add>, %144, %cst_88 [1] : vector<1x3x1xf32> to vector<1x1xf32>
      %146 = vector.shape_cast %145 : vector<1x1xf32> to vector<1x1x1xf32>
      %147 = math.log %146 : vector<1x1x1xf32>
      %148 = vector.broadcast %147 : vector<1x1x1xf32> to vector<1x3x8xf32>
      %149 = arith.subf %141, %148 : vector<1x3x8xf32>
      %cst_89 = arith.constant dense<0xFF800000> : vector<1x3xf32>
      %150 = vector.multi_reduction <maximumf>, %149, %cst_89 [2] : vector<1x3x8xf32> to vector<1x3xf32>
      %151 = vector.shape_cast %150 : vector<1x3xf32> to vector<1x3x1xf32>
      %cst_90 = arith.constant dense<0xFF800000> : vector<1x1xf32>
      %152 = vector.multi_reduction <maximumf>, %151, %cst_90 [1] : vector<1x3x1xf32> to vector<1x1xf32>
      %153 = vector.shape_cast %152 : vector<1x1xf32> to vector<1x1x1xf32>
      %154 = vector.broadcast %153 : vector<1x1x1xf32> to vector<1x3x8xf32>
      %155 = arith.cmpf oeq, %149, %154 : vector<1x3x8xf32>
      %cst_91 = arith.constant 2.400000e+01 : f32
      %156 = vector.broadcast %cst_91 : f32 to vector<1x3x8xf32>
      %157 = arith.select %155, %11, %156 : vector<1x3x8xi1>, vector<1x3x8xf32>
      %cst_92 = arith.constant dense<0x7F800000> : vector<1x3xf32>
      %158 = vector.multi_reduction <minimumf>, %157, %cst_92 [2] : vector<1x3x8xf32> to vector<1x3xf32>
      %159 = vector.shape_cast %158 : vector<1x3xf32> to vector<1x3x1xf32>
      %cst_93 = arith.constant dense<0x7F800000> : vector<1x1xf32>
      %160 = vector.multi_reduction <minimumf>, %159, %cst_93 [1] : vector<1x3x1xf32> to vector<1x1xf32>
      %161 = vector.shape_cast %160 : vector<1x1xf32> to vector<1x1x1xf32>
      %162 = vector.broadcast %161 : vector<1x1x1xf32> to vector<1x3x8xf32>
      %163 = arith.cmpf oeq, %11, %162 : vector<1x3x8xf32>
      %164 = arith.extui %163 : vector<1x3x8xi1> to vector<1x3x8xi32>
      %165 = arith.sitofp %164 : vector<1x3x8xi32> to vector<1x3x8xf32>
      %cst_94 = arith.constant dense<0.000000e+00> : vector<1x3xf32>
      %166 = vector.multi_reduction <add>, %165, %cst_94 [2] : vector<1x3x8xf32> to vector<1x3xf32>
      %167 = vector.shape_cast %166 : vector<1x3xf32> to vector<1x3x1xf32>
      %cst_95 = arith.constant dense<0.000000e+00> : vector<1x8xf32>
      %168 = vector.multi_reduction <add>, %165, %cst_95 [1] : vector<1x3x8xf32> to vector<1x8xf32>
      %169 = vector.shape_cast %168 : vector<1x8xf32> to vector<1x1x8xf32>
      %170 = arith.mulf %165, %149 : vector<1x3x8xf32>
      %cst_96 = arith.constant dense<0.000000e+00> : vector<1x3xf32>
      %171 = vector.multi_reduction <add>, %170, %cst_96 [2] : vector<1x3x8xf32> to vector<1x3xf32>
      %172 = vector.shape_cast %171 : vector<1x3xf32> to vector<1x3x1xf32>
      %cst_97 = arith.constant dense<0.000000e+00> : vector<1x1xf32>
      %173 = vector.multi_reduction <add>, %172, %cst_97 [1] : vector<1x3x1xf32> to vector<1x1xf32>
      %174 = vector.shape_cast %173 : vector<1x1xf32> to vector<1x1x1xf32>
      %175 = arith.addf %arg16, %174 : vector<1x1x1xf32>
      %176 = vector.broadcast %167 : vector<1x3x1xf32> to vector<1x3x8xf32>
      %177 = arith.mulf %176, %arg12 : vector<1x3x8xf32>
      %cst_98 = arith.constant dense<0.000000e+00> : vector<1x8xf32>
      %178 = vector.multi_reduction <add>, %177, %cst_98 [1] : vector<1x3x8xf32> to vector<1x8xf32>
      %179 = vector.shape_cast %178 : vector<1x8xf32> to vector<1x1x8xf32>
      %180 = arith.subf %169, %179 : vector<1x1x8xf32>
      %181 = vector.broadcast %180 : vector<1x1x8xf32> to vector<1x2x8xf32>
      %182 = arith.mulf %181, %2 : vector<1x2x8xf32>
      %cst_99 = arith.constant dense<0.000000e+00> : vector<1x2xf32>
      %183 = vector.multi_reduction <add>, %182, %cst_99 [2] : vector<1x2x8xf32> to vector<1x2xf32>
      %184 = vector.shape_cast %183 : vector<1x2xf32> to vector<1x2x1xf32>
      %185 = arith.mulf %184, %184 : vector<1x2x1xf32>
      %cst_100 = arith.constant dense<0.000000e+00> : vector<1x1xf32>
      %186 = vector.multi_reduction <add>, %185, %cst_100 [1] : vector<1x2x1xf32> to vector<1x1xf32>
      %187 = vector.shape_cast %186 : vector<1x1xf32> to vector<1x1x1xf32>
      %188 = math.sqrt %187 : vector<1x1x1xf32>
      %189 = vector.broadcast %188 : vector<1x1x1xf32> to vector<1x3x1xf32>
      %190 = arith.mulf %167, %189 : vector<1x3x1xf32>
      %191 = arith.addf %arg14, %190 : vector<1x3x1xf32>
      %192 = vector.broadcast %167 : vector<1x3x1xf32> to vector<1x3x8xf32>
      %193 = vector.broadcast %169 : vector<1x1x8xf32> to vector<1x3x8xf32>
      %194 = arith.mulf %192, %193 : vector<1x3x8xf32>
      %cst_101 = arith.constant 1.000000e+00 : f32
      %195 = vector.broadcast %cst_101 : f32 to vector<1x3x1xf32>
      %196 = arith.subf %195, %167 : vector<1x3x1xf32>
      %197 = vector.broadcast %196 : vector<1x3x1xf32> to vector<1x3x8xf32>
      %198 = arith.mulf %197, %arg12 : vector<1x3x8xf32>
      %199 = arith.addf %194, %198 : vector<1x3x8xf32>
      %200 = vector.broadcast %169 : vector<1x1x8xf32> to vector<1x3x8xf32>
      %201 = arith.maximumf %arg13, %200 : vector<1x3x8xf32>
      %202 = vector.broadcast %4 : vector<1x1x8xf32> to vector<1x3x8xf32>
      %203 = arith.mulf %199, %202 : vector<1x3x8xf32>
      %cst_102 = arith.constant dense<0.000000e+00> : vector<1x3xf32>
      %204 = vector.multi_reduction <add>, %203, %cst_102 [2] : vector<1x3x8xf32> to vector<1x3xf32>
      %205 = vector.shape_cast %204 : vector<1x3xf32> to vector<1x3x1xf32>
      %206 = vector.broadcast %arg11 : i32 to vector<1x1x9xi32>
      %207 = arith.cmpi eq, %12, %206 : vector<1x1x9xi32>
      %208 = arith.extui %207 : vector<1x1x9xi1> to vector<1x1x9xi32>
      %209 = arith.sitofp %208 : vector<1x1x9xi32> to vector<1x1x9xf32>
      %210 = vector.broadcast %205 : vector<1x3x1xf32> to vector<1x3x9xf32>
      %211 = vector.broadcast %209 : vector<1x1x9xf32> to vector<1x3x9xf32>
      %212 = arith.mulf %210, %211 : vector<1x3x9xf32>
      %213 = arith.addf %arg15, %212 : vector<1x3x9xf32>
      scf.yield %199, %201, %191, %213, %175 : vector<1x3x8xf32>, vector<1x3x8xf32>, vector<1x3x1xf32>, vector<1x3x9xf32>, vector<1x1x1xf32>
    }
    %c7_i32_18 = arith.constant 7 : i32
    %25 = arith.fptosi %24#3 : vector<1x3x9xf32> to vector<1x3x9xi32>
    %c0_19 = arith.constant 0 : index
    %c0_20 = arith.constant 0 : index
    %c0_21 = arith.constant 0 : index
    %26 = vector.load %arg9[%c0_19, %c0_20, %c0_21] : memref<1x3x9xi32, #tpu.memory_space<vmem>>, vector<1x3x9xi32>
    tpu.vector_store %arg9[%c0_19, %c0_20, %c0_21], %25 {strides = array<i32>} : memref<1x3x9xi32, #tpu.memory_space<vmem>>, vector<1x3x9xi32>,
    %c0_22 = arith.constant 0 : index
    %c0_23 = arith.constant 0 : index
    %c0_24 = arith.constant 0 : index
    %27 = vector.load %arg10[%c0_22, %c0_23, %c0_24] : memref<1x1x1xf32, #tpu.memory_space<vmem>>, vector<1x1x1xf32>
    tpu.vector_store %arg10[%c0_22, %c0_23, %c0_24], %24#4 {strides = array<i32>} : memref<1x1x1xf32, #tpu.memory_space<vmem>>, vector<1x1x1xf32>,
    return
  }
  func.func @transform_0(%arg0: i32, %arg1: memref<1xi32, #tpu.memory_space<smem>>) -> (i32, i32, i32) {
    %c0_i32 = arith.constant 0 : i32
    %c0_i32_0 = arith.constant 0 : i32
    %c0_i32_1 = arith.constant 0 : i32
    return %arg0, %c0_i32, %c0_i32_0 : i32, i32, i32
  }
  func.func @transform_1(%arg0: i32, %arg1: memref<1xi32, #tpu.memory_space<smem>>) -> (i32, i32, i32) {
    %c0_i32 = arith.constant 0 : i32
    %c0_i32_0 = arith.constant 0 : i32
    %c0_i32_1 = arith.constant 0 : i32
    return %arg0, %c0_i32, %c0_i32_0 : i32, i32, i32
  }
  func.func @transform_2(%arg0: i32, %arg1: memref<1xi32, #tpu.memory_space<smem>>) -> (i32, i32, i32) {
    %c0_i32 = arith.constant 0 : i32
    %c0_i32_0 = arith.constant 0 : i32
    %c0_i32_1 = arith.constant 0 : i32
    return %arg0, %c0_i32, %c0_i32_0 : i32, i32, i32
  }
  func.func @transform_3(%arg0: i32, %arg1: memref<1xi32, #tpu.memory_space<smem>>) -> (i32, i32, i32) {
    %c0_i32 = arith.constant 0 : i32
    %c0_i32_0 = arith.constant 0 : i32
    %c0_i32_1 = arith.constant 0 : i32
    return %arg0, %c0_i32, %c0_i32_0 : i32, i32, i32
  }
  func.func @transform_4(%arg0: i32, %arg1: memref<1xi32, #tpu.memory_space<smem>>) -> (i32, i32, i32) {
    %c0_i32 = arith.constant 0 : i32
    %c0_i32_0 = arith.constant 0 : i32
    %c0_i32_1 = arith.constant 0 : i32
    return %arg0, %c0_i32, %c0_i32_0 : i32, i32, i32
  }
  func.func @transform_5(%arg0: i32, %arg1: memref<1xi32, #tpu.memory_space<smem>>) -> (i32, i32, i32) {
    %c0_i32 = arith.constant 0 : i32
    %c0_i32_0 = arith.constant 0 : i32
    %c0_i32_1 = arith.constant 0 : i32
    %c0_i32_2 = arith.constant 0 : i32
    return %c0_i32, %c0_i32_0, %c0_i32_1 : i32, i32, i32
  }
  func.func @transform_6(%arg0: i32, %arg1: memref<1xi32, #tpu.memory_space<smem>>) -> (i32, i32, i32) {
    %c0_i32 = arith.constant 0 : i32
    %c0_i32_0 = arith.constant 0 : i32
    %c0_i32_1 = arith.constant 0 : i32
    return %arg0, %c0_i32, %c0_i32_0 : i32, i32, i32
  }
  func.func @transform_7(%arg0: i32, %arg1: memref<1xi32, #tpu.memory_space<smem>>) -> (i32, i32, i32) {
    %c0_i32 = arith.constant 0 : i32
    %c0_i32_0 = arith.constant 0 : i32
    %c0_i32_1 = arith.constant 0 : i32
    return %arg0, %c0_i32, %c0_i32_0 : i32, i32, i32
  }
  func.func @transform_8(%arg0: i32, %arg1: memref<1xi32, #tpu.memory_space<smem>>) -> (i32, i32, i32) {
    %c0_i32 = arith.constant 0 : i32
    %c0_i32_0 = arith.constant 0 : i32
    %c0_i32_1 = arith.constant 0 : i32
    return %arg0, %c0_i32, %c0_i32_0 : i32, i32, i32
  }
}

</mosaic_0001>

<llo_original>
// kernel: am_tsp_2d_limitveh_actor.2
$region0: #{am_tsp_2d_limitveh_actor.2}
  #allocation0 [shape = 'u32[]', space=smem, size = 0x4, offset = 0x4, fixed_abs, tag = 'smem constant byte address 0x4 - core index']
  #allocation1 [shape = 'u32[144,128]{1,0:T(1,128)}', space=vmem, size = 0x12000, scoped, tag = 'internal scratch']
  %s0 = inlined_call_operand.vmem [shape: f32[16,32], index: 0, kind: input, shape index: {}]
  %s1 = inlined_call_operand.vmem [shape: f32[32,128], index: 1, kind: input, shape index: {}]
  %s2 = inlined_call_operand.vmem [shape: f32[16,128], index: 2, kind: output, shape index: {}]
  %s3 = sld [smem:[#allocation0]]
  $region18: #{am_tsp_2d_limitveh_actor.2} parent=0
    _
  %s5 = ssub.s32 1, %s3
  %s6 = scalar_select 0, %s5, %s3
  // Predicated region
  $region2: #{am_tsp_2d_limitveh_actor.2} parent=0 // pred_check
    _
  $region3: #{am_tsp_2d_limitveh_actor.2} parent=0 // pred_check_branch
    %8 = sbr.rel (0) target = $region5
  $region4: #{am_tsp_2d_limitveh_actor.2} parent=0 // pred_region
    _
  $region5: #{am_tsp_2d_limitveh_actor.2} parent=0 // pred_fallthru
    _
  // Predicated region
  $region6: #{am_tsp_2d_limitveh_actor.2} parent=0 // pred_check
    _
  $region7: #{am_tsp_2d_limitveh_actor.2} parent=0 // pred_check_branch
    %10 = sbr.rel (0) target = $region9
  $region8: #{am_tsp_2d_limitveh_actor.2} parent=0 // pred_region
    _
  $region9: #{am_tsp_2d_limitveh_actor.2} parent=0 // pred_fallthru
    _
  %v11 = vld [vmem:[%s0] sm:$0xff]
  %v12 = vld [vmem:[%s0 + $0x8] sm:$0xff]
  %v13 = vld [vmem:[%s1] sm:$0xff]
  %v14 = vld [vmem:[%s1 + $0x8] sm:$0xff]
  %v15 = vld [vmem:[%s1 + $0x10] sm:$0xff]
  %v16 = vld [vmem:[%s1 + $0x18] sm:$0xff]
  %vm17 = vcmask 261120
  %v19 = vsel %vm17, %v11, 0
  %v22 = vsel %vm17, %v12, 0
  %24 = vmatprep.subr.mxu0 0.0
  %25 = vmatpush1.msra.mxu0 %v13
  %26 = vmatprep.subr.mxu0 0.0
  %27 = vmatpush1.msra.mxu0 %v14
  %28 = vmatprep.subr.mxu0 0.0
  %29 = vmatpush1.msra.mxu0 %v15
  %30 = vmatprep.subr.mxu0 0.0
  %31 = vmatpush1.msra.mxu0 %v16
  %32 = vmatprep.subr.mxu0 0.0
  %33 = vmatpush1.msra.mxu0 0.0
  %34 = vmatprep.subr.mxu0 0.0
  %35 = vmatpush1.msra.mxu0 0.0
  %36 = vmatprep.subr.mxu0 0.0
  %37 = vmatpush1.msra.mxu0 0.0
  %38 = vmatprep.subr.mxu0 0.0
  %39 = vmatpush1.msra.mxu0 0.0
  %40 = vmatprep.subr.mxu0 0.0
  %41 = vmatpush1.msra.mxu0 0.0
  %42 = vmatprep.subr.mxu0 0.0
  %43 = vmatpush1.msra.mxu0 0.0
  %44 = vmatprep.subr.mxu0 0.0
  %45 = vmatpush1.msra.mxu0 0.0
  %46 = vmatprep.subr.mxu0 0.0
  %47 = vmatpush1.msra.mxu0 0.0
  %48 = vmatprep.subr.mxu0 0.0
  %49 = vmatpush1.msra.mxu0 0.0
  %50 = vmatprep.subr.mxu0 0.0
  %51 = vmatpush1.msra.mxu0 0.0
  %52 = vmatprep.subr.mxu0 0.0
  %53 = vmatpush1.msra.mxu0 0.0
  %54 = vmatprep.subr.mxu0 0.0
  %55 = vmatpush1.msra.mxu0 0.0
  %56 = vmatprep.subr.mxu0 0.0
  %57 = vmatpush1.msra.mxu0 0.0
  %58 = vmatprep.subr.mxu0 0.0
  %59 = vmatpush1.msra.mxu0 0.0
  %60 = vmatprep.subr.mxu0 0.0
  %61 = vmatpush1.msra.mxu0 0.0
  %62 = vmatprep.subr.mxu0 0.0
  %63 = vmatpush1.msra.mxu0 0.0
  %64 = vmatprep.subr.mxu0 0.0
  %65 = vmatpush1.msra.mxu0 0.0
  %66 = vmatprep.subr.mxu0 0.0
  %67 = vmatpush1.msra.mxu0 0.0
  %68 = vmatprep.subr.mxu0 0.0
  %69 = vmatpush1.msra.mxu0 0.0
  %70 = vmatprep.subr.mxu0 0.0
  %71 = vmatpush1.msra.mxu0 0.0
  %72 = vmatprep.subr.mxu0 0.0
  %73 = vmatpush1.msra.mxu0 0.0
  %74 = vmatprep.subr.mxu0 0.0
  %75 = vmatpush1.msra.mxu0 0.0
  %76 = vmatprep.subr.mxu0 0.0
  %77 = vmatpush1.msra.mxu0 0.0
  %78 = vmatprep.subr.mxu0 0.0
  %79 = vmatpush1.msra.mxu0 0.0
  %80 = vmatprep.subr.mxu0 0.0
  %81 = vmatpush1.msra.mxu0 0.0
  %82 = vmatprep.subr.mxu0 0.0
  %83 = vmatpush1.msra.mxu0 0.0
  %84 = vmatprep.subr.mxu0 0.0
  %85 = vmatpush1.msra.mxu0 0.0
  %86 = vmatprep.subr.mxu0 0.0
  %87 = vmatpush1.msra.mxu0 0.0
  %88 = vmatprep.mubr.f32.mxu0 0.0
  %89 = vmatmul.mubr.f32.gmra.mrb[0].mxu0 %v19
  %v90 = vpop.f32.mrb[0].mxu0
  %v91 = vadd.f32 0.0, %v90
  %v92 = vpop.f32.mrb[0].mxu0
  %93 = vmatprep.mubr.f32.mxu0 0.0
  %94 = vmatmul.mubr.f32.gmra.mrb[0].mxu0 %v22
  %v95 = vpop.f32.mrb[0].mxu0
  %v96 = vadd.f32 0.0, %v95
  %v97 = vpop.f32.mrb[0].mxu0
  %98 = vdwg.mxu0
  %99 = vst [vmem:[%s2] sm:$0xff] %v91
  %100 = vst [vmem:[%s2 + $0x8] sm:$0xff] %v96
  // Predicated region
  $region10: #{am_tsp_2d_limitveh_actor.2} parent=0 // pred_check
    _
  $region11: #{am_tsp_2d_limitveh_actor.2} parent=0 // pred_check_branch
    %102 = sbr.rel (0) target = $region13
  $region12: #{am_tsp_2d_limitveh_actor.2} parent=0 // pred_region
    _
  $region13: #{am_tsp_2d_limitveh_actor.2} parent=0 // pred_fallthru
    _
  // Predicated region
  $region14: #{am_tsp_2d_limitveh_actor.2} parent=0 // pred_check
    _
  $region15: #{am_tsp_2d_limitveh_actor.2} parent=0 // pred_check_branch
    %104 = sbr.rel (0) target = $region17
  $region16: #{am_tsp_2d_limitveh_actor.2} parent=0 // pred_region
    _
  $region17: #{am_tsp_2d_limitveh_actor.2} parent=0 // pred_fallthru
    _

// kernel: am_tsp_2d_limitveh_actor.3
$region0: #{am_tsp_2d_limitveh_actor.3}
  #allocation0 [shape = 'u32[]', space=smem, size = 0x4, offset = 0x4, fixed_abs, tag = 'smem constant byte address 0x4 - core index']
  #allocation1 [shape = 'u32[144,128]{1,0:T(1,128)}', space=vmem, size = 0x12000, scoped, tag = 'internal scratch']
  #allocation2 [shape = 's32[1]{0}', space=sflag, size = 0x4, scoped, tag = 'scoped memory for am_tsp_2d_limitveh_actor.3']
  #allocation3 [shape = 's32[1]{0:T(128)S(6)}', space=smem, size = 0x200, scoped, tag = 'prefetched SMEM operand 0']
  %s0 = inlined_call_operand.<no memory space> [shape: s32[1], index: 0, kind: input, shape index: {}]
  %s1 = inlined_call_operand.vmem [shape: f32[2,8,32], index: 1, kind: input, shape index: {}]
  %s2 = inlined_call_operand.vmem [shape: f32[2,8,32], index: 2, kind: input, shape index: {}]
  %s3 = inlined_call_operand.vmem [shape: f32[2,8,32], index: 3, kind: input, shape index: {}]
  %s4 = inlined_call_operand.vmem [shape: f32[2,8,32], index: 4, kind: input, shape index: {}]
  %s5 = inlined_call_operand.vmem [shape: f32[2,1,32], index: 5, kind: input, shape index: {}]
  %s6 = inlined_call_operand.vmem [shape: f32[1,1,32], index: 6, kind: input, shape index: {}]
  %s7 = inlined_call_operand.vmem [shape: f32[2,2,8], index: 7, kind: input, shape index: {}]
  %s8 = inlined_call_operand.vmem [shape: s32[2,3,9], index: 8, kind: output, shape index: {0}]
  %s9 = inlined_call_operand.vmem [shape: f32[2,1,1], index: 9, kind: output, shape index: {1}]
  %10 = xla_tuple %s8, %s9
  %s11 = sld [smem:[#allocation0]]
  $region76: #{am_tsp_2d_limitveh_actor.3} parent=0
    _
  %s13 = ssub.s32 1, %s11
  %s14 = scalar_select 0, %s13, %s11
  %15 = sst [smem:[#allocation3]] %s0
  loop: start=0, step=1, limit=4
  $region2: #{am_tsp_2d_limitveh_actor.3} parent=0 // loop_pre_header
    _
  $region3: #{am_tsp_2d_limitveh_actor.3} parent=0 // loop_header
    %s17 = sphi 0, %s21
    %p18 = scmp.ge.s32.totalorder %s17, 4
    %s27 = sphi 0, %s29
    %s30 = sphi 0, %s27
    %s31 = sphi 0, %s30
    %s47 = sphi 0, %s31
    %s53 = sphi 0, %s55
    %s56 = sphi 0, %s53
    %s57 = sphi 0, %s56
    %s73 = sphi 0, %s57
    %s79 = sphi 0, %s81
    %s82 = sphi 0, %s79
    %s83 = sphi 0, %s82
    %s99 = sphi 0, %s83
    %s105 = sphi 0, %s107
    %s108 = sphi 0, %s105
    %s109 = sphi 0, %s108
    %s125 = sphi 0, %s109
    %s131 = sphi 0, %s133
    %s134 = sphi 0, %s131
    %s135 = sphi 0, %s134
    %s151 = sphi 0, %s135
    %s155 = sphi 0, %s155
    %s157 = sphi 0, %s155
    %s158 = sphi 0, %s157
    %s172 = sphi 0, %s158
    %s178 = sphi 0, %s180
    %s181 = sphi 0, %s178
    %s182 = sphi 0, %s181
    %s198 = sphi 0, %s182
    %s204 = sphi 0, %s206
    %s207 = sphi 0, %s204
    %s208 = sphi 0, %s207
    %s224 = sphi 0, %s208
    %s230 = sphi 0, %s232
    %s233 = sphi 0, %s230
    %s234 = sphi 0, %s233
    %s250 = sphi 0, %s234
  $region4: #{am_tsp_2d_limitveh_actor.3} parent=0 // loop_header_branch
    %20 = sbr.rel (%p18) target = $region8
  $region5: #{am_tsp_2d_limitveh_actor.3} parent=0 // loop_body
    %s22 = ssub.s32 %s17, 1
    %s23 = ssub.s32 %s17, 2
    %s24 = sadd.s32 %s17, 1
    %s25 = ssub.s32 %s17, %s24
    %p26 = scmp.eq.s32.totalorder %s25, 0
    %s28 = sadd.s32 %s27, 1
    %s29 = scalar_select %p26, %s27, %s28
    %p32 = pneg %p26
    %p33 = scmp.eq.s32.totalorder %s17, 1
    %p34 = por %p32, %p33
    %p35 = scmp.ne.s32.totalorder %s27, %s30
    %p36 = scmp.eq.s32.totalorder %s17, 0
    %p37 = por %p35, %p36
    %p38 = scmp.ne.s32.totalorder %s27, %s30
    %p39 = scmp.eq.s32.totalorder %s22, 1
    %p40 = por %p38, %p39
    %p41 = scmp.ne.s32.totalorder %s30, %s31
    %p42 = scmp.eq.s32.totalorder %s22, 0
    %p43 = por %p41, %p42
    %p44 = scmp.ne.s32.totalorder %s30, %s31
    %p45 = scmp.eq.s32.totalorder %s23, 1
    %p46 = por %p44, %p45
    %p48 = scmp.ne.s32.totalorder %s31, %s47
    %p49 = scmp.eq.s32.totalorder %s23, 0
    %p50 = por %p48, %p49
    %s51 = ssub.s32 %s17, %s24
    %p52 = scmp.eq.s32.totalorder %s51, 0
    %s54 = sadd.s32 %s53, 1
    %s55 = scalar_select %p52, %s53, %s54
    %p58 = pneg %p52
    %p59 = scmp.eq.s32.totalorder %s17, 1
    %p60 = por %p58, %p59
    %p61 = scmp.ne.s32.totalorder %s53, %s56
    %p62 = scmp.eq.s32.totalorder %s17, 0
    %p63 = por %p61, %p62
    %p64 = scmp.ne.s32.totalorder %s53, %s56
    %p65 = scmp.eq.s32.totalorder %s22, 1
    %p66 = por %p64, %p65
    %p67 = scmp.ne.s32.totalorder %s56, %s57
    %p68 = scmp.eq.s32.totalorder %s22, 0
    %p69 = por %p67, %p68
    %p70 = scmp.ne.s32.totalorder %s56, %s57
    %p71 = scmp.eq.s32.totalorder %s23, 1
    %p72 = por %p70, %p71
    %p74 = scmp.ne.s32.totalorder %s57, %s73
    %p75 = scmp.eq.s32.totalorder %s23, 0
    %p76 = por %p74, %p75
    %s77 = ssub.s32 %s17, %s24
    %p78 = scmp.eq.s32.totalorder %s77, 0
    %s80 = sadd.s32 %s79, 1
    %s81 = scalar_select %p78, %s79, %s80
    %p84 = pneg %p78
    %p85 = scmp.eq.s32.totalorder %s17, 1
    %p86 = por %p84, %p85
    %p87 = scmp.ne.s32.totalorder %s79, %s82
    %p88 = scmp.eq.s32.totalorder %s17, 0
    %p89 = por %p87, %p88
    %p90 = scmp.ne.s32.totalorder %s79, %s82
    %p91 = scmp.eq.s32.totalorder %s22, 1
    %p92 = por %p90, %p91
    %p93 = scmp.ne.s32.totalorder %s82, %s83
    %p94 = scmp.eq.s32.totalorder %s22, 0
    %p95 = por %p93, %p94
    %p96 = scmp.ne.s32.totalorder %s82, %s83
    %p97 = scmp.eq.s32.totalorder %s23, 1
    %p98 = por %p96, %p97
    %p100 = scmp.ne.s32.totalorder %s83, %s99
    %p101 = scmp.eq.s32.totalorder %s23, 0
    %p102 = por %p100, %p101
    %s103 = ssub.s32 %s17, %s24
    %p104 = scmp.eq.s32.totalorder %s103, 0
    %s106 = sadd.s32 %s105, 1
    %s107 = scalar_select %p104, %s105, %s106
    %p110 = pneg %p104
    %p111 = scmp.eq.s32.totalorder %s17, 1
    %p112 = por %p110, %p111
    %p113 = scmp.ne.s32.totalorder %s105, %s108
    %p114 = scmp.eq.s32.totalorder %s17, 0
    %p115 = por %p113, %p114
    %p116 = scmp.ne.s32.totalorder %s105, %s108
    %p117 = scmp.eq.s32.totalorder %s22, 1
    %p118 = por %p116, %p117
    %p119 = scmp.ne.s32.totalorder %s108, %s109
    %p120 = scmp.eq.s32.totalorder %s22, 0
    %p121 = por %p119, %p120
    %p122 = scmp.ne.s32.totalorder %s108, %s109
    %p123 = scmp.eq.s32.totalorder %s23, 1
    %p124 = por %p122, %p123
    %p126 = scmp.ne.s32.totalorder %s109, %s125
    %p127 = scmp.eq.s32.totalorder %s23, 0
    %p128 = por %p126, %p127
    %s129 = ssub.s32 %s17, %s24
    %p130 = scmp.eq.s32.totalorder %s129, 0
    %s132 = sadd.s32 %s131, 1
    %s133 = scalar_select %p130, %s131, %s132
    %p136 = pneg %p130
    %p137 = scmp.eq.s32.totalorder %s17, 1
    %p138 = por %p136, %p137
    %p139 = scmp.ne.s32.totalorder %s131, %s134
    %p140 = scmp.eq.s32.totalorder %s17, 0
    %p141 = por %p139, %p140
    %p142 = scmp.ne.s32.totalorder %s131, %s134
    %p143 = scmp.eq.s32.totalorder %s22, 1
    %p144 = por %p142, %p143
    %p145 = scmp.ne.s32.totalorder %s134, %s135
    %p146 = scmp.eq.s32.totalorder %s22, 0
    %p147 = por %p145, %p146
    %p148 = scmp.ne.s32.totalorder %s134, %s135
    %p149 = scmp.eq.s32.totalorder %s23, 1
    %p150 = por %p148, %p149
    %p152 = scmp.ne.s32.totalorder %s135, %s151
    %p153 = scmp.eq.s32.totalorder %s23, 0
    %p154 = por %p152, %p153
    %s156 = sadd.s32 %s155, 1
    %p159 = scmp.eq.s32.totalorder %s17, 1
    %p160 = scmp.ne.s32.totalorder %s155, %s157
    %p161 = scmp.eq.s32.totalorder %s17, 0
    %p162 = por %p160, %p161
    %p163 = scmp.ne.s32.totalorder %s155, %s157
    %p164 = scmp.eq.s32.totalorder %s22, 1
    %p165 = por %p163, %p164
    %p166 = scmp.ne.s32.totalorder %s157, %s158
    %p167 = scmp.eq.s32.totalorder %s22, 0
    %p168 = por %p166, %p167
    %p169 = scmp.ne.s32.totalorder %s157, %s158
    %p170 = scmp.eq.s32.totalorder %s23, 1
    %p171 = por %p169, %p170
    %p173 = scmp.ne.s32.totalorder %s158, %s172
    %p174 = scmp.eq.s32.totalorder %s23, 0
    %p175 = por %p173, %p174
    %s176 = ssub.s32 %s17, %s24
    %p177 = scmp.eq.s32.totalorder %s176, 0
    %s179 = sadd.s32 %s178, 1
    %s180 = scalar_select %p177, %s178, %s179
    %p183 = pneg %p177
    %p184 = scmp.eq.s32.totalorder %s17, 1
    %p185 = por %p183, %p184
    %p186 = scmp.ne.s32.totalorder %s178, %s181
    %p187 = scmp.eq.s32.totalorder %s17, 0
    %p188 = por %p186, %p187
    %p189 = scmp.ne.s32.totalorder %s178, %s181
    %p190 = scmp.eq.s32.totalorder %s22, 1
    %p191 = por %p189, %p190
    %p192 = scmp.ne.s32.totalorder %s181, %s182
    %p193 = scmp.eq.s32.totalorder %s22, 0
    %p194 = por %p192, %p193
    %p195 = scmp.ne.s32.totalorder %s181, %s182
    %p196 = scmp.eq.s32.totalorder %s23, 1
    %p197 = por %p195, %p196
    %p199 = scmp.ne.s32.totalorder %s182, %s198
    %p200 = scmp.eq.s32.totalorder %s23, 0
    %p201 = por %p199, %p200
    %s202 = ssub.s32 %s17, %s24
    %p203 = scmp.eq.s32.totalorder %s202, 0
    %s205 = sadd.s32 %s204, 1
    %s206 = scalar_select %p203, %s204, %s205
    %p209 = pneg %p203
    %p210 = scmp.eq.s32.totalorder %s17, 1
    %p211 = por %p209, %p210
    %p212 = scmp.ne.s32.totalorder %s204, %s207
    %p213 = scmp.eq.s32.totalorder %s17, 0
    %p214 = por %p212, %p213
    %p215 = scmp.ne.s32.totalorder %s204, %s207
    %p216 = scmp.eq.s32.totalorder %s22, 1
    %p217 = por %p215, %p216
    %p218 = scmp.ne.s32.totalorder %s207, %s208
    %p219 = scmp.eq.s32.totalorder %s22, 0
    %p220 = por %p218, %p219
    %p221 = scmp.ne.s32.totalorder %s207, %s208
    %p222 = scmp.eq.s32.totalorder %s23, 1
    %p223 = por %p221, %p222
    %p225 = scmp.ne.s32.totalorder %s208, %s224
    %p226 = scmp.eq.s32.totalorder %s23, 0
    %p227 = por %p225, %p226
    %s228 = ssub.s32 %s17, %s24
    %p229 = scmp.eq.s32.totalorder %s228, 0
    %s231 = sadd.s32 %s230, 1
    %s232 = scalar_select %p229, %s230, %s231
    %p235 = pneg %p229
    %p236 = scmp.eq.s32.totalorder %s17, 1
    %p237 = por %p235, %p236
    %p238 = scmp.ne.s32.totalorder %s230, %s233
    %p239 = scmp.eq.s32.totalorder %s17, 0
    %p240 = por %p238, %p239
    %p241 = scmp.ne.s32.totalorder %s230, %s233
    %p242 = scmp.eq.s32.totalorder %s22, 1
    %p243 = por %p241, %p242
    %p244 = scmp.ne.s32.totalorder %s233, %s234
    %p245 = scmp.eq.s32.totalorder %s22, 0
    %p246 = por %p244, %p245
    %p247 = scmp.ne.s32.totalorder %s233, %s234
    %p248 = scmp.eq.s32.totalorder %s23, 1
    %p249 = por %p247, %p248
    %p251 = scmp.ne.s32.totalorder %s234, %s250
    %p252 = scmp.eq.s32.totalorder %s23, 0
    %p253 = por %p251, %p252
    %p254 = scmp.le.s32.totalorder 1, %s17
    %p255 = scmp.lt.s32.totalorder %s17, 3
    %p256 = pnand %p254, %p255
    %p257 = pneg %p256
    // Predicated region
    $region9: #{am_tsp_2d_limitveh_actor.3} parent=5 // pred_check
      _
    $region10: #{am_tsp_2d_limitveh_actor.3} parent=5 // pred_check_branch
      %259 = sbr.rel (%p256) target = $region12
    $region11: #{am_tsp_2d_limitveh_actor.3} parent=5 // pred_region
      %s260 = ssub.s32 %s17, 1
      // Predicated region
      $region13: #{am_tsp_2d_limitveh_actor.3} parent=11 // pred_check
        %p261 = pneg %p168
      $region14: #{am_tsp_2d_limitveh_actor.3} parent=11 // pred_check_branch
        %263 = sbr.rel (%p261) target = $region16
      $region15: #{am_tsp_2d_limitveh_actor.3} parent=11 // pred_region
        _
      $region16: #{am_tsp_2d_limitveh_actor.3} parent=11 // pred_fallthru
        _
    $region12: #{am_tsp_2d_limitveh_actor.3} parent=5 // pred_fallthru
      _
    %p264 = scmp.lt.s32.totalorder %s17, 2
    // Predicated region
    $region17: #{am_tsp_2d_limitveh_actor.3} parent=5 // pred_check
      %p265 = pneg %p264
    $region18: #{am_tsp_2d_limitveh_actor.3} parent=5 // pred_check_branch
      %267 = sbr.rel (%p265) target = $region20
    $region19: #{am_tsp_2d_limitveh_actor.3} parent=5 // pred_region
      // Predicated region
      $region21: #{am_tsp_2d_limitveh_actor.3} parent=19 // pred_check
        %p268 = pneg %p37
      $region22: #{am_tsp_2d_limitveh_actor.3} parent=19 // pred_check_branch
        %270 = sbr.rel (%p268) target = $region24
      $region23: #{am_tsp_2d_limitveh_actor.3} parent=19 // pred_region
        %p271 = scmp.lt.s32.totalorder %s17, 1
        %s272 = scalar_select %p271, %s17, 1
        %s273 = smul.addr %s272, 8
        %s274 = scalar_lea.vmem %s1, %s273
      $region24: #{am_tsp_2d_limitveh_actor.3} parent=19 // pred_fallthru
        _
      // Predicated region
      $region25: #{am_tsp_2d_limitveh_actor.3} parent=19 // pred_check
        %p275 = pneg %p63
      $region26: #{am_tsp_2d_limitveh_actor.3} parent=19 // pred_check_branch
        %277 = sbr.rel (%p275) target = $region28
      $region27: #{am_tsp_2d_limitveh_actor.3} parent=19 // pred_region
        %p278 = scmp.lt.s32.totalorder %s17, 1
        %s279 = scalar_select %p278, %s17, 1
        %s280 = smul.addr %s279, 8
        %s281 = scalar_lea.vmem %s2, %s280
      $region28: #{am_tsp_2d_limitveh_actor.3} parent=19 // pred_fallthru
        _
      // Predicated region
      $region29: #{am_tsp_2d_limitveh_actor.3} parent=19 // pred_check
        %p282 = pneg %p89
      $region30: #{am_tsp_2d_limitveh_actor.3} parent=19 // pred_check_branch
        %284 = sbr.rel (%p282) target = $region32
      $region31: #{am_tsp_2d_limitveh_actor.3} parent=19 // pred_region
        %p285 = scmp.lt.s32.totalorder %s17, 1
        %s286 = scalar_select %p285, %s17, 1
        %s287 = smul.addr %s286, 8
        %s288 = scalar_lea.vmem %s3, %s287
      $region32: #{am_tsp_2d_limitveh_actor.3} parent=19 // pred_fallthru
        _
      // Predicated region
      $region33: #{am_tsp_2d_limitveh_actor.3} parent=19 // pred_check
        %p289 = pneg %p115
      $region34: #{am_tsp_2d_limitveh_actor.3} parent=19 // pred_check_branch
        %291 = sbr.rel (%p289) target = $region36
      $region35: #{am_tsp_2d_limitveh_actor.3} parent=19 // pred_region
        %p292 = scmp.lt.s32.totalorder %s17, 1
        %s293 = scalar_select %p292, %s17, 1
        %s294 = smul.addr %s293, 8
        %s295 = scalar_lea.vmem %s4, %s294
      $region36: #{am_tsp_2d_limitveh_actor.3} parent=19 // pred_fallthru
        _
      // Predicated region
      $region37: #{am_tsp_2d_limitveh_actor.3} parent=19 // pred_check
        %p296 = pneg %p141
      $region38: #{am_tsp_2d_limitveh_actor.3} parent=19 // pred_check_branch
        %298 = sbr.rel (%p296) target = $region40
      $region39: #{am_tsp_2d_limitveh_actor.3} parent=19 // pred_region
        %p299 = scmp.lt.s32.totalorder %s17, 1
        %s300 = scalar_select %p299, %s17, 1
        %s301 = scalar_lea.vmem %s5, %s300
      $region40: #{am_tsp_2d_limitveh_actor.3} parent=19 // pred_fallthru
        _
      // Predicated region
      $region41: #{am_tsp_2d_limitveh_actor.3} parent=19 // pred_check
        %p302 = pneg %p188
      $region42: #{am_tsp_2d_limitveh_actor.3} parent=19 // pred_check_branch
        %304 = sbr.rel (%p302) target = $region44
      $region43: #{am_tsp_2d_limitveh_actor.3} parent=19 // pred_region
        %p305 = scmp.lt.s32.totalorder %s17, 1
        %s306 = scalar_select %p305, %s17, 1
        %s307 = smul.addr %s306, 2
        %s308 = scalar_lea.vmem %s7, %s307
      $region44: #{am_tsp_2d_limitveh_actor.3} parent=19 // pred_fallthru
        _
    $region20: #{am_tsp_2d_limitveh_actor.3} parent=5 // pred_fallthru
      _
    %p309 = scmp.le.s32.totalorder 1, %s17
    %p310 = scmp.lt.s32.totalorder %s17, 3
    %p311 = pnand %p309, %p310
    %p312 = pneg %p311
    // Predicated region
    $region45: #{am_tsp_2d_limitveh_actor.3} parent=5 // pred_check
      _
    $region46: #{am_tsp_2d_limitveh_actor.3} parent=5 // pred_check_branch
      %314 = sbr.rel (%p311) target = $region48
    $region47: #{am_tsp_2d_limitveh_actor.3} parent=5 // pred_region
      %s315 = ssub.s32 %s17, 1
      %p316 = scmp.lt.s32.totalorder %s22, 1
      %s317 = scalar_select %p316, %s22, 1
      %s318 = smul.addr %s317, 8
      %s319 = scalar_lea.vmem %s1, %s318
      %p320 = pneg %p43
      %p321 = pneg %p40
      %p322 = scmp.lt.s32.totalorder %s22, 1
      %s323 = scalar_select %p322, %s22, 1
      %s324 = smul.addr %s323, 8
      %s325 = scalar_lea.vmem %s2, %s324
      %p326 = pneg %p69
      %p327 = pneg %p66
      %p328 = scmp.lt.s32.totalorder %s22, 1
      %s329 = scalar_select %p328, %s22, 1
      %s330 = smul.addr %s329, 8
      %s331 = scalar_lea.vmem %s3, %s330
      %p332 = pneg %p95
      %p333 = pneg %p92
      %p334 = scmp.lt.s32.totalorder %s22, 1
      %s335 = scalar_select %p334, %s22, 1
      %s336 = smul.addr %s335, 8
      %s337 = scalar_lea.vmem %s4, %s336
      %p338 = pneg %p121
      %p339 = pneg %p118
      %p340 = scmp.lt.s32.totalorder %s22, 1
      %s341 = scalar_select %p340, %s22, 1
      %s342 = scalar_lea.vmem %s5, %s341
      %p343 = pneg %p147
      %p344 = pneg %p144
      %p345 = pneg %p168
      %p346 = pneg %p165
      %p347 = scmp.lt.s32.totalorder %s22, 1
      %s348 = scalar_select %p347, %s22, 1
      %s349 = smul.addr %s348, 2
      %s350 = scalar_lea.vmem %s7, %s349
      %p351 = pneg %p194
      %p352 = pneg %p191
      %p353 = pneg %p220
      %p354 = pneg %p217
      %p355 = scmp.lt.s32.totalorder %s22, 1
      %s356 = scalar_select %p355, %s22, 1
      %s357 = smul.addr %s356, 4
      %s358 = scalar_lea.vmem %s8, %s357
      %p359 = pneg %p246
      %p360 = pneg %p243
      %p361 = scmp.lt.s32.totalorder %s22, 1
      %s362 = scalar_select %p361, %s22, 1
      %s363 = scalar_lea.vmem %s9, %s362
      %p364 = scmp.lt.s32.totalorder %s22, 1
      %s365 = scalar_select %p364, %s22, 1
      %s366 = smul.addr %s365, 8
      %s367 = scalar_lea.vmem %s1, %s366
      %p368 = scmp.lt.s32.totalorder %s22, 1
      %s369 = scalar_select %p368, %s22, 1
      %s370 = smul.addr %s369, 8
      %s371 = scalar_lea.vmem %s2, %s370
      %p372 = scmp.lt.s32.totalorder %s22, 1
      %s373 = scalar_select %p372, %s22, 1
      %s374 = smul.addr %s373, 8
      %s375 = scalar_lea.vmem %s3, %s374
      %p376 = scmp.lt.s32.totalorder %s22, 1
      %s377 = scalar_select %p376, %s22, 1
      %s378 = smul.addr %s377, 8
      %s379 = scalar_lea.vmem %s4, %s378
      %p380 = scmp.lt.s32.totalorder %s22, 1
      %s381 = scalar_select %p380, %s22, 1
      %s382 = scalar_lea.vmem %s5, %s381
      %p383 = scmp.lt.s32.totalorder %s22, 1
      %s384 = scalar_select %p383, %s22, 1
      %s385 = smul.addr %s384, 2
      %s386 = scalar_lea.vmem %s7, %s385
      %p387 = scmp.lt.s32.totalorder %s22, 1
      %s388 = scalar_select %p387, %s22, 1
      %s389 = smul.addr %s388, 4
      %s390 = scalar_lea.vmem %s8, %s389
      %p391 = scmp.lt.s32.totalorder %s22, 1
      %s392 = scalar_select %p391, %s22, 1
      %s393 = scalar_lea.vmem %s9, %s392
      %v394 = vld [vmem:[%s382] sm:$0x1]
      %v395 = vld [vmem:[%s6] sm:$0x1]
      %v396 = vld [vmem:[%s386] sm:$0x3]
      %v397 = vlaneseq
      %v398 = vand.u32 %v397, 127
      %v399 = vcvt.s32.f32 %v398
      %v400 = vlaneseq
      %v401 = vshrl.u32 %v400, 7
      %v402 = vcvt.s32.f32 %v401
      %v403 = vmul.f32 %v402, 8.0
      %v404 = vadd.f32 %v403, %v399
      %vm405 = vcmp.eq.f32.partialorder %v399, 0.0
      %v406 = vsel %vm405, 1, 0
      %v407 = vcvt.s32.f32 %v406
      %v408 = vadd.f32 %v407, 0.0
      loop: start=1, step=1, limit=8
      $region49: #{am_tsp_2d_limitveh_actor.3} parent=47 // loop_pre_header
        _
      $region50: #{am_tsp_2d_limitveh_actor.3} parent=47 // loop_header
        %s410 = sphi 1, %s414
        %p411 = scmp.ge.s32.totalorder %s410, 8
        %v415 = vphi %v408, %v1608
        %v416 = vphi %v408, %v1609
        %v417 = vphi 0.0, %v1604
        %v418 = vphi 0.0, %v1619
        %v419 = vphi 0.0, %v1572
      $region51: #{am_tsp_2d_limitveh_actor.3} parent=47 // loop_header_branch
        %413 = sbr.rel (%p411) target = $region55
      $region52: #{am_tsp_2d_limitveh_actor.3} parent=47 // loop_body
        %vm420 = vcmask 1042432
        %v421 = vsel %vm420, %v417, inf
        %v422 = vrot.slane %v421, 4
        %v423 = vmin.f32 %v421, %v422
        %v424 = vrot.slane %v423, 2
        %v425 = vmin.f32 %v423, %v424
        %v426 = vrot.slane %v425, 1
        %v427 = vmin.f32 %v425, %v426
        %v428 = vsub.f32 %v417, %v427
        %v429 = vld [vmem:[%s379] sm:$0xff]
        %v431 = vlaneseq
        %v432 = vshrl.u32 %v431, 7
        %v433 = vsub.s32 0, %v432
        %v434 = vrot.slane %v394, %v433
        %vm436 = vcmask 64512
        %v438 = vsel %vm436, %v415, 0
        %440 = vmatprep.subr.mxu0 0.0
        %441 = vmatpush1.msra.mxu0 %v429
        %442 = vmatprep.subr.mxu0 0.0
        %443 = vmatpush1.msra.mxu0 0.0
        %444 = vmatprep.subr.mxu0 0.0
        %445 = vmatpush1.msra.mxu0 0.0
        %446 = vmatprep.subr.mxu0 0.0
        %447 = vmatpush1.msra.mxu0 0.0
        %448 = vmatprep.subr.mxu0 0.0
        %449 = vmatpush1.msra.mxu0 0.0
        %450 = vmatprep.subr.mxu0 0.0
        %451 = vmatpush1.msra.mxu0 0.0
        %452 = vmatprep.subr.mxu0 0.0
        %453 = vmatpush1.msra.mxu0 0.0
        %454 = vmatprep.subr.mxu0 0.0
        %455 = vmatpush1.msra.mxu0 0.0
        %456 = vmatprep.subr.mxu0 0.0
        %457 = vmatpush1.msra.mxu0 0.0
        %458 = vmatprep.subr.mxu0 0.0
        %459 = vmatpush1.msra.mxu0 0.0
        %460 = vmatprep.subr.mxu0 0.0
        %461 = vmatpush1.msra.mxu0 0.0
        %462 = vmatprep.subr.mxu0 0.0
        %463 = vmatpush1.msra.mxu0 0.0
        %464 = vmatprep.subr.mxu0 0.0
        %465 = vmatpush1.msra.mxu0 0.0
        %466 = vmatprep.subr.mxu0 0.0
        %467 = vmatpush1.msra.mxu0 0.0
        %468 = vmatprep.subr.mxu0 0.0
        %469 = vmatpush1.msra.mxu0 0.0
        %470 = vmatprep.subr.mxu0 0.0
        %471 = vmatpush1.msra.mxu0 0.0
        %472 = vmatprep.subr.mxu0 0.0
        %473 = vmatpush1.msra.mxu0 0.0
        %474 = vmatprep.subr.mxu0 0.0
        %475 = vmatpush1.msra.mxu0 0.0
        %476 = vmatprep.subr.mxu0 0.0
        %477 = vmatpush1.msra.mxu0 0.0
        %478 = vmatprep.subr.mxu0 0.0
        %479 = vmatpush1.msra.mxu0 0.0
        %480 = vmatprep.subr.mxu0 0.0
        %481 = vmatpush1.msra.mxu0 0.0
        %482 = vmatprep.subr.mxu0 0.0
        %483 = vmatpush1.msra.mxu0 0.0
        %484 = vmatprep.subr.mxu0 0.0
        %485 = vmatpush1.msra.mxu0 0.0
        %486 = vmatprep.subr.mxu0 0.0
        %487 = vmatpush1.msra.mxu0 0.0
        %488 = vmatprep.subr.mxu0 0.0
        %489 = vmatpush1.msra.mxu0 0.0
        %490 = vmatprep.subr.mxu0 0.0
        %491 = vmatpush1.msra.mxu0 0.0
        %492 = vmatprep.subr.mxu0 0.0
        %493 = vmatpush1.msra.mxu0 0.0
        %494 = vmatprep.subr.mxu0 0.0
        %495 = vmatpush1.msra.mxu0 0.0
        %496 = vmatprep.subr.mxu0 0.0
        %497 = vmatpush1.msra.mxu0 0.0
        %498 = vmatprep.subr.mxu0 0.0
        %499 = vmatpush1.msra.mxu0 0.0
        %500 = vmatprep.subr.mxu0 0.0
        %501 = vmatpush1.msra.mxu0 0.0
        %502 = vmatprep.subr.mxu0 0.0
        %503 = vmatpush1.msra.mxu0 0.0
        %504 = vmatprep.mubr.f32.mxu0 0.0
        %505 = vmatmul.mubr.f32.gmra.mrb[0].mxu0 %v438
        %v506 = vpop.f32.mrb[0].mxu0
        %v507 = vadd.f32 %v434, %v506
        %v508 = vpop.f32.mrb[0].mxu0
        %509 = vdwg.mxu0
        %v511 = vlaneseq
        %v512 = vshrl.u32 %v511, 7
        %v513 = vsub.s32 0, %v512
        %v514 = vrot.slane %v395, %v513
        %v516 = vmul.f32 %v428, %v514
        %v517 = vadd.f32 %v507, %v516
        %v518 = vmul.f32 %v416, -1e+09
        %v519 = vld [vmem:[%s367] sm:$0xff]
        %v521 = vsel %vm436, %v517, 0
        %v524 = vsel %vm436, %v519, 0
        %526 = vmatprep.subr.mxu0 0.0
        %527 = vmatpush1.xpose.msra.mxu0 %v524
        %528 = vmatprep.subr.mxu0 0.0
        %529 = vmatpush1.xpose.msra.mxu0 0.0
        %530 = vmatprep.subr.mxu0 0.0
        %531 = vmatpush1.xpose.msra.mxu0 0.0
        %532 = vmatprep.subr.mxu0 0.0
        %533 = vmatpush1.xpose.msra.mxu0 0.0
        %534 = vmatprep.subr.mxu0 0.0
        %535 = vmatpush1.xpose.msra.mxu0 0.0
        %536 = vmatprep.subr.mxu0 0.0
        %537 = vmatpush1.xpose.msra.mxu0 0.0
        %538 = vmatprep.subr.mxu0 0.0
        %539 = vmatpush1.xpose.msra.mxu0 0.0
        %540 = vmatprep.subr.mxu0 0.0
        %541 = vmatpush1.xpose.msra.mxu0 0.0
        %542 = vmatprep.subr.mxu0 0.0
        %543 = vmatpush1.xpose.msra.mxu0 0.0
        %544 = vmatprep.subr.mxu0 0.0
        %545 = vmatpush1.xpose.msra.mxu0 0.0
        %546 = vmatprep.subr.mxu0 0.0
        %547 = vmatpush1.xpose.msra.mxu0 0.0
        %548 = vmatprep.subr.mxu0 0.0
        %549 = vmatpush1.xpose.msra.mxu0 0.0
        %550 = vmatprep.subr.mxu0 0.0
        %551 = vmatpush1.xpose.msra.mxu0 0.0
        %552 = vmatprep.subr.mxu0 0.0
        %553 = vmatpush1.xpose.msra.mxu0 0.0
        %554 = vmatprep.subr.mxu0 0.0
        %555 = vmatpush1.xpose.msra.mxu0 0.0
        %556 = vmatprep.subr.mxu0 0.0
        %557 = vmatpush1.xpose.msra.mxu0 0.0
        %558 = vmatprep.subr.mxu0 0.0
        %559 = vmatpush1.xpose.msra.mxu0 0.0
        %560 = vmatprep.subr.mxu0 0.0
        %561 = vmatpush1.xpose.msra.mxu0 0.0
        %562 = vmatprep.subr.mxu0 0.0
        %563 = vmatpush1.xpose.msra.mxu0 0.0
        %564 = vmatprep.subr.mxu0 0.0
        %565 = vmatpush1.xpose.msra.mxu0 0.0
        %566 = vmatprep.subr.mxu0 0.0
        %567 = vmatpush1.xpose.msra.mxu0 0.0
        %568 = vmatprep.subr.mxu0 0.0
        %569 = vmatpush1.xpose.msra.mxu0 0.0
        %570 = vmatprep.subr.mxu0 0.0
        %571 = vmatpush1.xpose.msra.mxu0 0.0
        %572 = vmatprep.subr.mxu0 0.0
        %573 = vmatpush1.xpose.msra.mxu0 0.0
        %574 = vmatprep.subr.mxu0 0.0
        %575 = vmatpush1.xpose.msra.mxu0 0.0
        %576 = vmatprep.subr.mxu0 0.0
        %577 = vmatpush1.xpose.msra.mxu0 0.0
        %578 = vmatprep.subr.mxu0 0.0
        %579 = vmatpush1.xpose.msra.mxu0 0.0
        %580 = vmatprep.subr.mxu0 0.0
        %581 = vmatpush1.xpose.msra.mxu0 0.0
        %582 = vmatprep.subr.mxu0 0.0
        %583 = vmatpush1.xpose.msra.mxu0 0.0
        %584 = vmatprep.subr.mxu0 0.0
        %585 = vmatpush1.xpose.msra.mxu0 0.0
        %586 = vmatprep.subr.mxu0 0.0
        %587 = vmatpush1.xpose.msra.mxu0 0.0
        %588 = vmatprep.subr.mxu0 0.0
        %589 = vmatpush1.xpose.msra.mxu0 0.0
        %590 = vmatprep.mubr.f32.mxu0 0.0
        %591 = vmatmul.mubr.f32.gmra.mrb[0].mxu0 %v521
        %v592 = vpop.f32.mrb[0].mxu0
        %v593 = vadd.f32 0.0, %v592
        %v594 = vpop.f32.mrb[0].mxu0
        %595 = vdwg.mxu0
        %v596 = vmul.f32 %v593, 0.35355338
        %v597 = vadd.f32 %v596, %v518
        %vm598 = vcmask 59392
        %v599 = vsel %vm598, %v597, -inf
        %600 = vmax.xlane.f32.xlu0 %v599
        %v601 = vpop.xlane.xlu0 %600
        %v602 = vsub.f32 %v597, %v601
        %v603 = vmul.f32 %v602, 1.442695
        %v604 = vpow.pop %v603
        %v605 = vsel %vm598, %v604, 0.0
        %606 = vadd.xlane.f32.xlu0 %v605
        %v607 = vpop.xlane.xlu0 %606
        %v608 = vrcp.pop %v607
        %v609 = vmul.f32 %v604, %v608
        %v610 = vld [vmem:[%s371] sm:$0xff]
        %v612 = vsel %vm436, %v609, 0
        %614 = vmatprep.subr.mxu0 0.0
        %615 = vmatpush1.msra.mxu0 %v610
        %616 = vmatprep.subr.mxu0 0.0
        %617 = vmatpush1.msra.mxu0 0.0
        %618 = vmatprep.subr.mxu0 0.0
        %619 = vmatpush1.msra.mxu0 0.0
        %620 = vmatprep.subr.mxu0 0.0
        %621 = vmatpush1.msra.mxu0 0.0
        %622 = vmatprep.subr.mxu0 0.0
        %623 = vmatpush1.msra.mxu0 0.0
        %624 = vmatprep.subr.mxu0 0.0
        %625 = vmatpush1.msra.mxu0 0.0
        %626 = vmatprep.subr.mxu0 0.0
        %627 = vmatpush1.msra.mxu0 0.0
        %628 = vmatprep.subr.mxu0 0.0
        %629 = vmatpush1.msra.mxu0 0.0
        %630 = vmatprep.subr.mxu0 0.0
        %631 = vmatpush1.msra.mxu0 0.0
        %632 = vmatprep.subr.mxu0 0.0
        %633 = vmatpush1.msra.mxu0 0.0
        %634 = vmatprep.subr.mxu0 0.0
        %635 = vmatpush1.msra.mxu0 0.0
        %636 = vmatprep.subr.mxu0 0.0
        %637 = vmatpush1.msra.mxu0 0.0
        %638 = vmatprep.subr.mxu0 0.0
        %639 = vmatpush1.msra.mxu0 0.0
        %640 = vmatprep.subr.mxu0 0.0
        %641 = vmatpush1.msra.mxu0 0.0
        %642 = vmatprep.subr.mxu0 0.0
        %643 = vmatpush1.msra.mxu0 0.0
        %644 = vmatprep.subr.mxu0 0.0
        %645 = vmatpush1.msra.mxu0 0.0
        %646 = vmatprep.subr.mxu0 0.0
        %647 = vmatpush1.msra.mxu0 0.0
        %648 = vmatprep.subr.mxu0 0.0
        %649 = vmatpush1.msra.mxu0 0.0
        %650 = vmatprep.subr.mxu0 0.0
        %651 = vmatpush1.msra.mxu0 0.0
        %652 = vmatprep.subr.mxu0 0.0
        %653 = vmatpush1.msra.mxu0 0.0
        %654 = vmatprep.subr.mxu0 0.0
        %655 = vmatpush1.msra.mxu0 0.0
        %656 = vmatprep.subr.mxu0 0.0
        %657 = vmatpush1.msra.mxu0 0.0
        %658 = vmatprep.subr.mxu0 0.0
        %659 = vmatpush1.msra.mxu0 0.0
        %660 = vmatprep.subr.mxu0 0.0
        %661 = vmatpush1.msra.mxu0 0.0
        %662 = vmatprep.subr.mxu0 0.0
        %663 = vmatpush1.msra.mxu0 0.0
        %664 = vmatprep.subr.mxu0 0.0
        %665 = vmatpush1.msra.mxu0 0.0
        %666 = vmatprep.subr.mxu0 0.0
        %667 = vmatpush1.msra.mxu0 0.0
        %668 = vmatprep.subr.mxu0 0.0
        %669 = vmatpush1.msra.mxu0 0.0
        %670 = vmatprep.subr.mxu0 0.0
        %671 = vmatpush1.msra.mxu0 0.0
        %672 = vmatprep.subr.mxu0 0.0
        %673 = vmatpush1.msra.mxu0 0.0
        %674 = vmatprep.subr.mxu0 0.0
        %675 = vmatpush1.msra.mxu0 0.0
        %676 = vmatprep.subr.mxu0 0.0
        %677 = vmatpush1.msra.mxu0 0.0
        %678 = vmatprep.mubr.f32.mxu0 0.0
        %679 = vmatmul.mubr.f32.gmra.mrb[0].mxu0 %v612
        %v680 = vpop.f32.mrb[0].mxu0
        %v681 = vadd.f32 0.0, %v680
        %v682 = vpop.f32.mrb[0].mxu0
        %683 = vdwg.mxu0
        %v684 = vld [vmem:[%s375] sm:$0xff]
        %685 = vrot.lane.b32.xlu0 %v517, 120
        %v686 = vpop.permute.xlu0 %685
        %687 = vrot.lane.b32.xlu0 %v519, 120
        %v688 = vpop.permute.xlu0 %687
        %v689 = vsel %vm436, %v686, 0
        %v691 = vsel %vm436, %v688, 0
        %693 = vmatprep.subr.mxu0 0.0
        %694 = vmatpush1.xpose.msra.mxu0 %v691
        %695 = vmatprep.subr.mxu0 0.0
        %696 = vmatpush1.xpose.msra.mxu0 0.0
        %697 = vmatprep.subr.mxu0 0.0
        %698 = vmatpush1.xpose.msra.mxu0 0.0
        %699 = vmatprep.subr.mxu0 0.0
        %700 = vmatpush1.xpose.msra.mxu0 0.0
        %701 = vmatprep.subr.mxu0 0.0
        %702 = vmatpush1.xpose.msra.mxu0 0.0
        %703 = vmatprep.subr.mxu0 0.0
        %704 = vmatpush1.xpose.msra.mxu0 0.0
        %705 = vmatprep.subr.mxu0 0.0
        %706 = vmatpush1.xpose.msra.mxu0 0.0
        %707 = vmatprep.subr.mxu0 0.0
        %708 = vmatpush1.xpose.msra.mxu0 0.0
        %709 = vmatprep.subr.mxu0 0.0
        %710 = vmatpush1.xpose.msra.mxu0 0.0
        %711 = vmatprep.subr.mxu0 0.0
        %712 = vmatpush1.xpose.msra.mxu0 0.0
        %713 = vmatprep.subr.mxu0 0.0
        %714 = vmatpush1.xpose.msra.mxu0 0.0
        %715 = vmatprep.subr.mxu0 0.0
        %716 = vmatpush1.xpose.msra.mxu0 0.0
        %717 = vmatprep.subr.mxu0 0.0
        %718 = vmatpush1.xpose.msra.mxu0 0.0
        %719 = vmatprep.subr.mxu0 0.0
        %720 = vmatpush1.xpose.msra.mxu0 0.0
        %721 = vmatprep.subr.mxu0 0.0
        %722 = vmatpush1.xpose.msra.mxu0 0.0
        %723 = vmatprep.subr.mxu0 0.0
        %724 = vmatpush1.xpose.msra.mxu0 0.0
        %725 = vmatprep.subr.mxu0 0.0
        %726 = vmatpush1.xpose.msra.mxu0 0.0
        %727 = vmatprep.subr.mxu0 0.0
        %728 = vmatpush1.xpose.msra.mxu0 0.0
        %729 = vmatprep.subr.mxu0 0.0
        %730 = vmatpush1.xpose.msra.mxu0 0.0
        %731 = vmatprep.subr.mxu0 0.0
        %732 = vmatpush1.xpose.msra.mxu0 0.0
        %733 = vmatprep.subr.mxu0 0.0
        %734 = vmatpush1.xpose.msra.mxu0 0.0
        %735 = vmatprep.subr.mxu0 0.0
        %736 = vmatpush1.xpose.msra.mxu0 0.0
        %737 = vmatprep.subr.mxu0 0.0
        %738 = vmatpush1.xpose.msra.mxu0 0.0
        %739 = vmatprep.subr.mxu0 0.0
        %740 = vmatpush1.xpose.msra.mxu0 0.0
        %741 = vmatprep.subr.mxu0 0.0
        %742 = vmatpush1.xpose.msra.mxu0 0.0
        %743 = vmatprep.subr.mxu0 0.0
        %744 = vmatpush1.xpose.msra.mxu0 0.0
        %745 = vmatprep.subr.mxu0 0.0
        %746 = vmatpush1.xpose.msra.mxu0 0.0
        %747 = vmatprep.subr.mxu0 0.0
        %748 = vmatpush1.xpose.msra.mxu0 0.0
        %749 = vmatprep.subr.mxu0 0.0
        %750 = vmatpush1.xpose.msra.mxu0 0.0
        %751 = vmatprep.subr.mxu0 0.0
        %752 = vmatpush1.xpose.msra.mxu0 0.0
        %753 = vmatprep.subr.mxu0 0.0
        %754 = vmatpush1.xpose.msra.mxu0 0.0
        %755 = vmatprep.subr.mxu0 0.0
        %756 = vmatpush1.xpose.msra.mxu0 0.0
        %757 = vmatprep.mubr.f32.mxu0 0.0
        %758 = vmatmul.mubr.f32.gmra.mrb[0].mxu0 %v689
        %v759 = vpop.f32.mrb[0].mxu0
        %v760 = vadd.f32 0.0, %v759
        %v761 = vpop.f32.mrb[0].mxu0
        %762 = vdwg.mxu0
        %v763 = vmul.f32 %v760, 0.35355338
        %v764 = vadd.f32 %v763, %v518
        %v765 = vsel %vm598, %v764, -inf
        %766 = vmax.xlane.f32.xlu0 %v765
        %v767 = vpop.xlane.xlu0 %766
        %v768 = vsub.f32 %v764, %v767
        %v769 = vmul.f32 %v768, 1.442695
        %v770 = vpow.pop %v769
        %v771 = vsel %vm598, %v770, 0.0
        %772 = vadd.xlane.f32.xlu0 %v771
        %v773 = vpop.xlane.xlu0 %772
        %v774 = vrcp.pop %v773
        %v775 = vmul.f32 %v770, %v774
        %777 = vrot.lane.b32.xlu0 %v610, 120
        %v778 = vpop.permute.xlu0 %777
        %v781 = vsel %vm436, %v775, 0
        %783 = vmatprep.subr.mxu0 0.0
        %784 = vmatpush1.msra.mxu0 %v778
        %785 = vmatprep.subr.mxu0 0.0
        %786 = vmatpush1.msra.mxu0 0.0
        %787 = vmatprep.subr.mxu0 0.0
        %788 = vmatpush1.msra.mxu0 0.0
        %789 = vmatprep.subr.mxu0 0.0
        %790 = vmatpush1.msra.mxu0 0.0
        %791 = vmatprep.subr.mxu0 0.0
        %792 = vmatpush1.msra.mxu0 0.0
        %793 = vmatprep.subr.mxu0 0.0
        %794 = vmatpush1.msra.mxu0 0.0
        %795 = vmatprep.subr.mxu0 0.0
        %796 = vmatpush1.msra.mxu0 0.0
        %797 = vmatprep.subr.mxu0 0.0
        %798 = vmatpush1.msra.mxu0 0.0
        %799 = vmatprep.subr.mxu0 0.0
        %800 = vmatpush1.msra.mxu0 0.0
        %801 = vmatprep.subr.mxu0 0.0
        %802 = vmatpush1.msra.mxu0 0.0
        %803 = vmatprep.subr.mxu0 0.0
        %804 = vmatpush1.msra.mxu0 0.0
        %805 = vmatprep.subr.mxu0 0.0
        %806 = vmatpush1.msra.mxu0 0.0
        %807 = vmatprep.subr.mxu0 0.0
        %808 = vmatpush1.msra.mxu0 0.0
        %809 = vmatprep.subr.mxu0 0.0
        %810 = vmatpush1.msra.mxu0 0.0
        %811 = vmatprep.subr.mxu0 0.0
        %812 = vmatpush1.msra.mxu0 0.0
        %813 = vmatprep.subr.mxu0 0.0
        %814 = vmatpush1.msra.mxu0 0.0
        %815 = vmatprep.subr.mxu0 0.0
        %816 = vmatpush1.msra.mxu0 0.0
        %817 = vmatprep.subr.mxu0 0.0
        %818 = vmatpush1.msra.mxu0 0.0
        %819 = vmatprep.subr.mxu0 0.0
        %820 = vmatpush1.msra.mxu0 0.0
        %821 = vmatprep.subr.mxu0 0.0
        %822 = vmatpush1.msra.mxu0 0.0
        %823 = vmatprep.subr.mxu0 0.0
        %824 = vmatpush1.msra.mxu0 0.0
        %825 = vmatprep.subr.mxu0 0.0
        %826 = vmatpush1.msra.mxu0 0.0
        %827 = vmatprep.subr.mxu0 0.0
        %828 = vmatpush1.msra.mxu0 0.0
        %829 = vmatprep.subr.mxu0 0.0
        %830 = vmatpush1.msra.mxu0 0.0
        %831 = vmatprep.subr.mxu0 0.0
        %832 = vmatpush1.msra.mxu0 0.0
        %833 = vmatprep.subr.mxu0 0.0
        %834 = vmatpush1.msra.mxu0 0.0
        %835 = vmatprep.subr.mxu0 0.0
        %836 = vmatpush1.msra.mxu0 0.0
        %837 = vmatprep.subr.mxu0 0.0
        %838 = vmatpush1.msra.mxu0 0.0
        %839 = vmatprep.subr.mxu0 0.0
        %840 = vmatpush1.msra.mxu0 0.0
        %841 = vmatprep.subr.mxu0 0.0
        %842 = vmatpush1.msra.mxu0 0.0
        %843 = vmatprep.subr.mxu0 0.0
        %844 = vmatpush1.msra.mxu0 0.0
        %845 = vmatprep.subr.mxu0 0.0
        %846 = vmatpush1.msra.mxu0 0.0
        %847 = vmatprep.mubr.f32.mxu0 0.0
        %848 = vmatmul.mubr.f32.gmra.mrb[0].mxu0 %v781
        %v849 = vpop.f32.mrb[0].mxu0
        %v850 = vadd.f32 0.0, %v849
        %v851 = vpop.f32.mrb[0].mxu0
        %852 = vdwg.mxu0
        %854 = vrot.lane.b32.xlu0 %v684, 120
        %v855 = vpop.permute.xlu0 %854
        %v857 = vsel %vm436, %v850, 0
        %v859 = vsel %vm436, %v855, 0
        %861 = vmatprep.subr.mxu0 0.0
        %862 = vmatpush1.xpose.msra.mxu0 %v859
        %863 = vmatprep.subr.mxu0 0.0
        %864 = vmatpush1.xpose.msra.mxu0 0.0
        %865 = vmatprep.subr.mxu0 0.0
        %866 = vmatpush1.xpose.msra.mxu0 0.0
        %867 = vmatprep.subr.mxu0 0.0
        %868 = vmatpush1.xpose.msra.mxu0 0.0
        %869 = vmatprep.subr.mxu0 0.0
        %870 = vmatpush1.xpose.msra.mxu0 0.0
        %871 = vmatprep.subr.mxu0 0.0
        %872 = vmatpush1.xpose.msra.mxu0 0.0
        %873 = vmatprep.subr.mxu0 0.0
        %874 = vmatpush1.xpose.msra.mxu0 0.0
        %875 = vmatprep.subr.mxu0 0.0
        %876 = vmatpush1.xpose.msra.mxu0 0.0
        %877 = vmatprep.subr.mxu0 0.0
        %878 = vmatpush1.xpose.msra.mxu0 0.0
        %879 = vmatprep.subr.mxu0 0.0
        %880 = vmatpush1.xpose.msra.mxu0 0.0
        %881 = vmatprep.subr.mxu0 0.0
        %882 = vmatpush1.xpose.msra.mxu0 0.0
        %883 = vmatprep.subr.mxu0 0.0
        %884 = vmatpush1.xpose.msra.mxu0 0.0
        %885 = vmatprep.subr.mxu0 0.0
        %886 = vmatpush1.xpose.msra.mxu0 0.0
        %887 = vmatprep.subr.mxu0 0.0
        %888 = vmatpush1.xpose.msra.mxu0 0.0
        %889 = vmatprep.subr.mxu0 0.0
        %890 = vmatpush1.xpose.msra.mxu0 0.0
        %891 = vmatprep.subr.mxu0 0.0
        %892 = vmatpush1.xpose.msra.mxu0 0.0
        %893 = vmatprep.subr.mxu0 0.0
        %894 = vmatpush1.xpose.msra.mxu0 0.0
        %895 = vmatprep.subr.mxu0 0.0
        %896 = vmatpush1.xpose.msra.mxu0 0.0
        %897 = vmatprep.subr.mxu0 0.0
        %898 = vmatpush1.xpose.msra.mxu0 0.0
        %899 = vmatprep.subr.mxu0 0.0
        %900 = vmatpush1.xpose.msra.mxu0 0.0
        %901 = vmatprep.subr.mxu0 0.0
        %902 = vmatpush1.xpose.msra.mxu0 0.0
        %903 = vmatprep.subr.mxu0 0.0
        %904 = vmatpush1.xpose.msra.mxu0 0.0
        %905 = vmatprep.subr.mxu0 0.0
        %906 = vmatpush1.xpose.msra.mxu0 0.0
        %907 = vmatprep.subr.mxu0 0.0
        %908 = vmatpush1.xpose.msra.mxu0 0.0
        %909 = vmatprep.subr.mxu0 0.0
        %910 = vmatpush1.xpose.msra.mxu0 0.0
        %911 = vmatprep.subr.mxu0 0.0
        %912 = vmatpush1.xpose.msra.mxu0 0.0
        %913 = vmatprep.subr.mxu0 0.0
        %914 = vmatpush1.xpose.msra.mxu0 0.0
        %915 = vmatprep.subr.mxu0 0.0
        %916 = vmatpush1.xpose.msra.mxu0 0.0
        %917 = vmatprep.subr.mxu0 0.0
        %918 = vmatpush1.xpose.msra.mxu0 0.0
        %919 = vmatprep.subr.mxu0 0.0
        %920 = vmatpush1.xpose.msra.mxu0 0.0
        %921 = vmatprep.subr.mxu0 0.0
        %922 = vmatpush1.xpose.msra.mxu0 0.0
        %923 = vmatprep.subr.mxu0 0.0
        %924 = vmatpush1.xpose.msra.mxu0 0.0
        %925 = vmatprep.mubr.f32.mxu0 0.0
        %926 = vmatmul.mubr.f32.gmra.mrb[0].mxu0 %v857
        %v927 = vpop.f32.mrb[0].mxu0
        %v928 = vadd.f32 0.0, %v927
        %v929 = vpop.f32.mrb[0].mxu0
        %930 = vdwg.mxu0
        %v932 = vsel %vm436, %v681, 0
        %v934 = vsel %vm436, %v684, 0
        %936 = vmatprep.subr.mxu0 0.0
        %937 = vmatpush1.xpose.msra.mxu0 %v934
        %938 = vmatprep.subr.mxu0 0.0
        %939 = vmatpush1.xpose.msra.mxu0 0.0
        %940 = vmatprep.subr.mxu0 0.0
        %941 = vmatpush1.xpose.msra.mxu0 0.0
        %942 = vmatprep.subr.mxu0 0.0
        %943 = vmatpush1.xpose.msra.mxu0 0.0
        %944 = vmatprep.subr.mxu0 0.0
        %945 = vmatpush1.xpose.msra.mxu0 0.0
        %946 = vmatprep.subr.mxu0 0.0
        %947 = vmatpush1.xpose.msra.mxu0 0.0
        %948 = vmatprep.subr.mxu0 0.0
        %949 = vmatpush1.xpose.msra.mxu0 0.0
        %950 = vmatprep.subr.mxu0 0.0
        %951 = vmatpush1.xpose.msra.mxu0 0.0
        %952 = vmatprep.subr.mxu0 0.0
        %953 = vmatpush1.xpose.msra.mxu0 0.0
        %954 = vmatprep.subr.mxu0 0.0
        %955 = vmatpush1.xpose.msra.mxu0 0.0
        %956 = vmatprep.subr.mxu0 0.0
        %957 = vmatpush1.xpose.msra.mxu0 0.0
        %958 = vmatprep.subr.mxu0 0.0
        %959 = vmatpush1.xpose.msra.mxu0 0.0
        %960 = vmatprep.subr.mxu0 0.0
        %961 = vmatpush1.xpose.msra.mxu0 0.0
        %962 = vmatprep.subr.mxu0 0.0
        %963 = vmatpush1.xpose.msra.mxu0 0.0
        %964 = vmatprep.subr.mxu0 0.0
        %965 = vmatpush1.xpose.msra.mxu0 0.0
        %966 = vmatprep.subr.mxu0 0.0
        %967 = vmatpush1.xpose.msra.mxu0 0.0
        %968 = vmatprep.subr.mxu0 0.0
        %969 = vmatpush1.xpose.msra.mxu0 0.0
        %970 = vmatprep.subr.mxu0 0.0
        %971 = vmatpush1.xpose.msra.mxu0 0.0
        %972 = vmatprep.subr.mxu0 0.0
        %973 = vmatpush1.xpose.msra.mxu0 0.0
        %974 = vmatprep.subr.mxu0 0.0
        %975 = vmatpush1.xpose.msra.mxu0 0.0
        %976 = vmatprep.subr.mxu0 0.0
        %977 = vmatpush1.xpose.msra.mxu0 0.0
        %978 = vmatprep.subr.mxu0 0.0
        %979 = vmatpush1.xpose.msra.mxu0 0.0
        %980 = vmatprep.subr.mxu0 0.0
        %981 = vmatpush1.xpose.msra.mxu0 0.0
        %982 = vmatprep.subr.mxu0 0.0
        %983 = vmatpush1.xpose.msra.mxu0 0.0
        %984 = vmatprep.subr.mxu0 0.0
        %985 = vmatpush1.xpose.msra.mxu0 0.0
        %986 = vmatprep.subr.mxu0 0.0
        %987 = vmatpush1.xpose.msra.mxu0 0.0
        %988 = vmatprep.subr.mxu0 0.0
        %989 = vmatpush1.xpose.msra.mxu0 0.0
        %990 = vmatprep.subr.mxu0 0.0
        %991 = vmatpush1.xpose.msra.mxu0 0.0
        %992 = vmatprep.subr.mxu0 0.0
        %993 = vmatpush1.xpose.msra.mxu0 0.0
        %994 = vmatprep.subr.mxu0 0.0
        %995 = vmatpush1.xpose.msra.mxu0 0.0
        %996 = vmatprep.subr.mxu0 0.0
        %997 = vmatpush1.xpose.msra.mxu0 0.0
        %998 = vmatprep.subr.mxu0 0.0
        %999 = vmatpush1.xpose.msra.mxu0 0.0
        %1000 = vmatprep.mubr.f32.mxu0 0.0
        %1001 = vmatmul.mubr.f32.gmra.mrb[0].mxu0 %v932
        %v1002 = vpop.f32.mrb[0].mxu0
        %v1003 = vadd.f32 %v928, %v1002
        %v1004 = vpop.f32.mrb[0].mxu0
        %1005 = vdwg.mxu0
        %1006 = vrot.lane.b32.xlu0 %v517, 112
        %v1007 = vpop.permute.xlu0 %1006
        %1008 = vrot.lane.b32.xlu0 %v519, 112
        %v1009 = vpop.permute.xlu0 %1008
        %v1010 = vsel %vm436, %v1007, 0
        %v1012 = vsel %vm436, %v1009, 0
        %1014 = vmatprep.subr.mxu0 0.0
        %1015 = vmatpush1.xpose.msra.mxu0 %v1012
        %1016 = vmatprep.subr.mxu0 0.0
        %1017 = vmatpush1.xpose.msra.mxu0 0.0
        %1018 = vmatprep.subr.mxu0 0.0
        %1019 = vmatpush1.xpose.msra.mxu0 0.0
        %1020 = vmatprep.subr.mxu0 0.0
        %1021 = vmatpush1.xpose.msra.mxu0 0.0
        %1022 = vmatprep.subr.mxu0 0.0
        %1023 = vmatpush1.xpose.msra.mxu0 0.0
        %1024 = vmatprep.subr.mxu0 0.0
        %1025 = vmatpush1.xpose.msra.mxu0 0.0
        %1026 = vmatprep.subr.mxu0 0.0
        %1027 = vmatpush1.xpose.msra.mxu0 0.0
        %1028 = vmatprep.subr.mxu0 0.0
        %1029 = vmatpush1.xpose.msra.mxu0 0.0
        %1030 = vmatprep.subr.mxu0 0.0
        %1031 = vmatpush1.xpose.msra.mxu0 0.0
        %1032 = vmatprep.subr.mxu0 0.0
        %1033 = vmatpush1.xpose.msra.mxu0 0.0
        %1034 = vmatprep.subr.mxu0 0.0
        %1035 = vmatpush1.xpose.msra.mxu0 0.0
        %1036 = vmatprep.subr.mxu0 0.0
        %1037 = vmatpush1.xpose.msra.mxu0 0.0
        %1038 = vmatprep.subr.mxu0 0.0
        %1039 = vmatpush1.xpose.msra.mxu0 0.0
        %1040 = vmatprep.subr.mxu0 0.0
        %1041 = vmatpush1.xpose.msra.mxu0 0.0
        %1042 = vmatprep.subr.mxu0 0.0
        %1043 = vmatpush1.xpose.msra.mxu0 0.0
        %1044 = vmatprep.subr.mxu0 0.0
        %1045 = vmatpush1.xpose.msra.mxu0 0.0
        %1046 = vmatprep.subr.mxu0 0.0
        %1047 = vmatpush1.xpose.msra.mxu0 0.0
        %1048 = vmatprep.subr.mxu0 0.0
        %1049 = vmatpush1.xpose.msra.mxu0 0.0
        %1050 = vmatprep.subr.mxu0 0.0
        %1051 = vmatpush1.xpose.msra.mxu0 0.0
        %1052 = vmatprep.subr.mxu0 0.0
        %1053 = vmatpush1.xpose.msra.mxu0 0.0
        %1054 = vmatprep.subr.mxu0 0.0
        %1055 = vmatpush1.xpose.msra.mxu0 0.0
        %1056 = vmatprep.subr.mxu0 0.0
        %1057 = vmatpush1.xpose.msra.mxu0 0.0
        %1058 = vmatprep.subr.mxu0 0.0
        %1059 = vmatpush1.xpose.msra.mxu0 0.0
        %1060 = vmatprep.subr.mxu0 0.0
        %1061 = vmatpush1.xpose.msra.mxu0 0.0
        %1062 = vmatprep.subr.mxu0 0.0
        %1063 = vmatpush1.xpose.msra.mxu0 0.0
        %1064 = vmatprep.subr.mxu0 0.0
        %1065 = vmatpush1.xpose.msra.mxu0 0.0
        %1066 = vmatprep.subr.mxu0 0.0
        %1067 = vmatpush1.xpose.msra.mxu0 0.0
        %1068 = vmatprep.subr.mxu0 0.0
        %1069 = vmatpush1.xpose.msra.mxu0 0.0
        %1070 = vmatprep.subr.mxu0 0.0
        %1071 = vmatpush1.xpose.msra.mxu0 0.0
        %1072 = vmatprep.subr.mxu0 0.0
        %1073 = vmatpush1.xpose.msra.mxu0 0.0
        %1074 = vmatprep.subr.mxu0 0.0
        %1075 = vmatpush1.xpose.msra.mxu0 0.0
        %1076 = vmatprep.subr.mxu0 0.0
        %1077 = vmatpush1.xpose.msra.mxu0 0.0
        %1078 = vmatprep.mubr.f32.mxu0 0.0
        %1079 = vmatmul.mubr.f32.gmra.mrb[0].mxu0 %v1010
        %v1080 = vpop.f32.mrb[0].mxu0
        %v1081 = vadd.f32 0.0, %v1080
        %v1082 = vpop.f32.mrb[0].mxu0
        %1083 = vdwg.mxu0
        %v1084 = vmul.f32 %v1081, 0.35355338
        %v1085 = vadd.f32 %v1084, %v518
        %v1086 = vsel %vm598, %v1085, -inf
        %1087 = vmax.xlane.f32.xlu0 %v1086
        %v1088 = vpop.xlane.xlu0 %1087
        %v1089 = vsub.f32 %v1085, %v1088
        %v1090 = vmul.f32 %v1089, 1.442695
        %v1091 = vpow.pop %v1090
        %v1092 = vsel %vm598, %v1091, 0.0
        %1093 = vadd.xlane.f32.xlu0 %v1092
        %v1094 = vpop.xlane.xlu0 %1093
        %v1095 = vrcp.pop %v1094
        %v1096 = vmul.f32 %v1091, %v1095
        %1097 = vrot.lane.b32.xlu0 %v610, 112
        %v1098 = vpop.permute.xlu0 %1097
        %v1101 = vsel %vm436, %v1096, 0
        %1103 = vmatprep.subr.mxu0 0.0
        %1104 = vmatpush1.msra.mxu0 %v1098
        %1105 = vmatprep.subr.mxu0 0.0
        %1106 = vmatpush1.msra.mxu0 0.0
        %1107 = vmatprep.subr.mxu0 0.0
        %1108 = vmatpush1.msra.mxu0 0.0
        %1109 = vmatprep.subr.mxu0 0.0
        %1110 = vmatpush1.msra.mxu0 0.0
        %1111 = vmatprep.subr.mxu0 0.0
        %1112 = vmatpush1.msra.mxu0 0.0
        %1113 = vmatprep.subr.mxu0 0.0
        %1114 = vmatpush1.msra.mxu0 0.0
        %1115 = vmatprep.subr.mxu0 0.0
        %1116 = vmatpush1.msra.mxu0 0.0
        %1117 = vmatprep.subr.mxu0 0.0
        %1118 = vmatpush1.msra.mxu0 0.0
        %1119 = vmatprep.subr.mxu0 0.0
        %1120 = vmatpush1.msra.mxu0 0.0
        %1121 = vmatprep.subr.mxu0 0.0
        %1122 = vmatpush1.msra.mxu0 0.0
        %1123 = vmatprep.subr.mxu0 0.0
        %1124 = vmatpush1.msra.mxu0 0.0
        %1125 = vmatprep.subr.mxu0 0.0
        %1126 = vmatpush1.msra.mxu0 0.0
        %1127 = vmatprep.subr.mxu0 0.0
        %1128 = vmatpush1.msra.mxu0 0.0
        %1129 = vmatprep.subr.mxu0 0.0
        %1130 = vmatpush1.msra.mxu0 0.0
        %1131 = vmatprep.subr.mxu0 0.0
        %1132 = vmatpush1.msra.mxu0 0.0
        %1133 = vmatprep.subr.mxu0 0.0
        %1134 = vmatpush1.msra.mxu0 0.0
        %1135 = vmatprep.subr.mxu0 0.0
        %1136 = vmatpush1.msra.mxu0 0.0
        %1137 = vmatprep.subr.mxu0 0.0
        %1138 = vmatpush1.msra.mxu0 0.0
        %1139 = vmatprep.subr.mxu0 0.0
        %1140 = vmatpush1.msra.mxu0 0.0
        %1141 = vmatprep.subr.mxu0 0.0
        %1142 = vmatpush1.msra.mxu0 0.0
        %1143 = vmatprep.subr.mxu0 0.0
        %1144 = vmatpush1.msra.mxu0 0.0
        %1145 = vmatprep.subr.mxu0 0.0
        %1146 = vmatpush1.msra.mxu0 0.0
        %1147 = vmatprep.subr.mxu0 0.0
        %1148 = vmatpush1.msra.mxu0 0.0
        %1149 = vmatprep.subr.mxu0 0.0
        %1150 = vmatpush1.msra.mxu0 0.0
        %1151 = vmatprep.subr.mxu0 0.0
        %1152 = vmatpush1.msra.mxu0 0.0
        %1153 = vmatprep.subr.mxu0 0.0
        %1154 = vmatpush1.msra.mxu0 0.0
        %1155 = vmatprep.subr.mxu0 0.0
        %1156 = vmatpush1.msra.mxu0 0.0
        %1157 = vmatprep.subr.mxu0 0.0
        %1158 = vmatpush1.msra.mxu0 0.0
        %1159 = vmatprep.subr.mxu0 0.0
        %1160 = vmatpush1.msra.mxu0 0.0
        %1161 = vmatprep.subr.mxu0 0.0
        %1162 = vmatpush1.msra.mxu0 0.0
        %1163 = vmatprep.subr.mxu0 0.0
        %1164 = vmatpush1.msra.mxu0 0.0
        %1165 = vmatprep.subr.mxu0 0.0
        %1166 = vmatpush1.msra.mxu0 0.0
        %1167 = vmatprep.mubr.f32.mxu0 0.0
        %1168 = vmatmul.mubr.f32.gmra.mrb[0].mxu0 %v1101
        %v1169 = vpop.f32.mrb[0].mxu0
        %v1170 = vadd.f32 0.0, %v1169
        %v1171 = vpop.f32.mrb[0].mxu0
        %1172 = vdwg.mxu0
        %1173 = vrot.lane.b32.xlu0 %v684, 112
        %v1174 = vpop.permute.xlu0 %1173
        %v1176 = vsel %vm436, %v1170, 0
        %v1178 = vsel %vm436, %v1174, 0
        %1180 = vmatprep.subr.mxu0 0.0
        %1181 = vmatpush1.xpose.msra.mxu0 %v1178
        %1182 = vmatprep.subr.mxu0 0.0
        %1183 = vmatpush1.xpose.msra.mxu0 0.0
        %1184 = vmatprep.subr.mxu0 0.0
        %1185 = vmatpush1.xpose.msra.mxu0 0.0
        %1186 = vmatprep.subr.mxu0 0.0
        %1187 = vmatpush1.xpose.msra.mxu0 0.0
        %1188 = vmatprep.subr.mxu0 0.0
        %1189 = vmatpush1.xpose.msra.mxu0 0.0
        %1190 = vmatprep.subr.mxu0 0.0
        %1191 = vmatpush1.xpose.msra.mxu0 0.0
        %1192 = vmatprep.subr.mxu0 0.0
        %1193 = vmatpush1.xpose.msra.mxu0 0.0
        %1194 = vmatprep.subr.mxu0 0.0
        %1195 = vmatpush1.xpose.msra.mxu0 0.0
        %1196 = vmatprep.subr.mxu0 0.0
        %1197 = vmatpush1.xpose.msra.mxu0 0.0
        %1198 = vmatprep.subr.mxu0 0.0
        %1199 = vmatpush1.xpose.msra.mxu0 0.0
        %1200 = vmatprep.subr.mxu0 0.0
        %1201 = vmatpush1.xpose.msra.mxu0 0.0
        %1202 = vmatprep.subr.mxu0 0.0
        %1203 = vmatpush1.xpose.msra.mxu0 0.0
        %1204 = vmatprep.subr.mxu0 0.0
        %1205 = vmatpush1.xpose.msra.mxu0 0.0
        %1206 = vmatprep.subr.mxu0 0.0
        %1207 = vmatpush1.xpose.msra.mxu0 0.0
        %1208 = vmatprep.subr.mxu0 0.0
        %1209 = vmatpush1.xpose.msra.mxu0 0.0
        %1210 = vmatprep.subr.mxu0 0.0
        %1211 = vmatpush1.xpose.msra.mxu0 0.0
        %1212 = vmatprep.subr.mxu0 0.0
        %1213 = vmatpush1.xpose.msra.mxu0 0.0
        %1214 = vmatprep.subr.mxu0 0.0
        %1215 = vmatpush1.xpose.msra.mxu0 0.0
        %1216 = vmatprep.subr.mxu0 0.0
        %1217 = vmatpush1.xpose.msra.mxu0 0.0
        %1218 = vmatprep.subr.mxu0 0.0
        %1219 = vmatpush1.xpose.msra.mxu0 0.0
        %1220 = vmatprep.subr.mxu0 0.0
        %1221 = vmatpush1.xpose.msra.mxu0 0.0
        %1222 = vmatprep.subr.mxu0 0.0
        %1223 = vmatpush1.xpose.msra.mxu0 0.0
        %1224 = vmatprep.subr.mxu0 0.0
        %1225 = vmatpush1.xpose.msra.mxu0 0.0
        %1226 = vmatprep.subr.mxu0 0.0
        %1227 = vmatpush1.xpose.msra.mxu0 0.0
        %1228 = vmatprep.subr.mxu0 0.0
        %1229 = vmatpush1.xpose.msra.mxu0 0.0
        %1230 = vmatprep.subr.mxu0 0.0
        %1231 = vmatpush1.xpose.msra.mxu0 0.0
        %1232 = vmatprep.subr.mxu0 0.0
        %1233 = vmatpush1.xpose.msra.mxu0 0.0
        %1234 = vmatprep.subr.mxu0 0.0
        %1235 = vmatpush1.xpose.msra.mxu0 0.0
        %1236 = vmatprep.subr.mxu0 0.0
        %1237 = vmatpush1.xpose.msra.mxu0 0.0
        %1238 = vmatprep.subr.mxu0 0.0
        %1239 = vmatpush1.xpose.msra.mxu0 0.0
        %1240 = vmatprep.subr.mxu0 0.0
        %1241 = vmatpush1.xpose.msra.mxu0 0.0
        %1242 = vmatprep.subr.mxu0 0.0
        %1243 = vmatpush1.xpose.msra.mxu0 0.0
        %1244 = vmatprep.mubr.f32.mxu0 0.0
        %1245 = vmatmul.mubr.f32.gmra.mrb[0].mxu0 %v1176
        %v1246 = vpop.f32.mrb[0].mxu0
        %v1247 = vadd.f32 0.0, %v1246
        %v1248 = vpop.f32.mrb[0].mxu0
        %1249 = vdwg.mxu0
        %v1250 = vadd.f32 %v1003, %v1247
        %1251 = vrot.lane.b32.xlu0 %v517, 104
        %v1252 = vpop.permute.xlu0 %1251
        %1253 = vrot.lane.b32.xlu0 %v519, 104
        %v1254 = vpop.permute.xlu0 %1253
        %v1255 = vsel %vm436, %v1252, 0
        %v1257 = vsel %vm436, %v1254, 0
        %1259 = vmatprep.subr.mxu0 0.0
        %1260 = vmatpush1.xpose.msra.mxu0 %v1257
        %1261 = vmatprep.subr.mxu0 0.0
        %1262 = vmatpush1.xpose.msra.mxu0 0.0
        %1263 = vmatprep.subr.mxu0 0.0
        %1264 = vmatpush1.xpose.msra.mxu0 0.0
        %1265 = vmatprep.subr.mxu0 0.0
        %1266 = vmatpush1.xpose.msra.mxu0 0.0
        %1267 = vmatprep.subr.mxu0 0.0
        %1268 = vmatpush1.xpose.msra.mxu0 0.0
        %1269 = vmatprep.subr.mxu0 0.0
        %1270 = vmatpush1.xpose.msra.mxu0 0.0
        %1271 = vmatprep.subr.mxu0 0.0
        %1272 = vmatpush1.xpose.msra.mxu0 0.0
        %1273 = vmatprep.subr.mxu0 0.0
        %1274 = vmatpush1.xpose.msra.mxu0 0.0
        %1275 = vmatprep.subr.mxu0 0.0
        %1276 = vmatpush1.xpose.msra.mxu0 0.0
        %1277 = vmatprep.subr.mxu0 0.0
        %1278 = vmatpush1.xpose.msra.mxu0 0.0
        %1279 = vmatprep.subr.mxu0 0.0
        %1280 = vmatpush1.xpose.msra.mxu0 0.0
        %1281 = vmatprep.subr.mxu0 0.0
        %1282 = vmatpush1.xpose.msra.mxu0 0.0
        %1283 = vmatprep.subr.mxu0 0.0
        %1284 = vmatpush1.xpose.msra.mxu0 0.0
        %1285 = vmatprep.subr.mxu0 0.0
        %1286 = vmatpush1.xpose.msra.mxu0 0.0
        %1287 = vmatprep.subr.mxu0 0.0
        %1288 = vmatpush1.xpose.msra.mxu0 0.0
        %1289 = vmatprep.subr.mxu0 0.0
        %1290 = vmatpush1.xpose.msra.mxu0 0.0
        %1291 = vmatprep.subr.mxu0 0.0
        %1292 = vmatpush1.xpose.msra.mxu0 0.0
        %1293 = vmatprep.subr.mxu0 0.0
        %1294 = vmatpush1.xpose.msra.mxu0 0.0
        %1295 = vmatprep.subr.mxu0 0.0
        %1296 = vmatpush1.xpose.msra.mxu0 0.0
        %1297 = vmatprep.subr.mxu0 0.0
        %1298 = vmatpush1.xpose.msra.mxu0 0.0
        %1299 = vmatprep.subr.mxu0 0.0
        %1300 = vmatpush1.xpose.msra.mxu0 0.0
        %1301 = vmatprep.subr.mxu0 0.0
        %1302 = vmatpush1.xpose.msra.mxu0 0.0
        %1303 = vmatprep.subr.mxu0 0.0
        %1304 = vmatpush1.xpose.msra.mxu0 0.0
        %1305 = vmatprep.subr.mxu0 0.0
        %1306 = vmatpush1.xpose.msra.mxu0 0.0
        %1307 = vmatprep.subr.mxu0 0.0
        %1308 = vmatpush1.xpose.msra.mxu0 0.0
        %1309 = vmatprep.subr.mxu0 0.0
        %1310 = vmatpush1.xpose.msra.mxu0 0.0
        %1311 = vmatprep.subr.mxu0 0.0
        %1312 = vmatpush1.xpose.msra.mxu0 0.0
        %1313 = vmatprep.subr.mxu0 0.0
        %1314 = vmatpush1.xpose.msra.mxu0 0.0
        %1315 = vmatprep.subr.mxu0 0.0
        %1316 = vmatpush1.xpose.msra.mxu0 0.0
        %1317 = vmatprep.subr.mxu0 0.0
        %1318 = vmatpush1.xpose.msra.mxu0 0.0
        %1319 = vmatprep.subr.mxu0 0.0
        %1320 = vmatpush1.xpose.msra.mxu0 0.0
        %1321 = vmatprep.subr.mxu0 0.0
        %1322 = vmatpush1.xpose.msra.mxu0 0.0
        %1323 = vmatprep.mubr.f32.mxu0 0.0
        %1324 = vmatmul.mubr.f32.gmra.mrb[0].mxu0 %v1255
        %v1325 = vpop.f32.mrb[0].mxu0
        %v1326 = vadd.f32 0.0, %v1325
        %v1327 = vpop.f32.mrb[0].mxu0
        %1328 = vdwg.mxu0
        %v1329 = vmul.f32 %v1326, 0.35355338
        %v1330 = vadd.f32 %v1329, %v518
        %v1331 = vsel %vm598, %v1330, -inf
        %1332 = vmax.xlane.f32.xlu0 %v1331
        %v1333 = vpop.xlane.xlu0 %1332
        %v1334 = vsub.f32 %v1330, %v1333
        %v1335 = vmul.f32 %v1334, 1.442695
        %v1336 = vpow.pop %v1335
        %v1337 = vsel %vm598, %v1336, 0.0
        %1338 = vadd.xlane.f32.xlu0 %v1337
        %v1339 = vpop.xlane.xlu0 %1338
        %v1340 = vrcp.pop %v1339
        %v1341 = vmul.f32 %v1336, %v1340
        %1342 = vrot.lane.b32.xlu0 %v610, 104
        %v1343 = vpop.permute.xlu0 %1342
        %v1346 = vsel %vm436, %v1341, 0
        %1348 = vmatprep.subr.mxu0 0.0
        %1349 = vmatpush1.msra.mxu0 %v1343
        %1350 = vmatprep.subr.mxu0 0.0
        %1351 = vmatpush1.msra.mxu0 0.0
        %1352 = vmatprep.subr.mxu0 0.0
        %1353 = vmatpush1.msra.mxu0 0.0
        %1354 = vmatprep.subr.mxu0 0.0
        %1355 = vmatpush1.msra.mxu0 0.0
        %1356 = vmatprep.subr.mxu0 0.0
        %1357 = vmatpush1.msra.mxu0 0.0
        %1358 = vmatprep.subr.mxu0 0.0
        %1359 = vmatpush1.msra.mxu0 0.0
        %1360 = vmatprep.subr.mxu0 0.0
        %1361 = vmatpush1.msra.mxu0 0.0
        %1362 = vmatprep.subr.mxu0 0.0
        %1363 = vmatpush1.msra.mxu0 0.0
        %1364 = vmatprep.subr.mxu0 0.0
        %1365 = vmatpush1.msra.mxu0 0.0
        %1366 = vmatprep.subr.mxu0 0.0
        %1367 = vmatpush1.msra.mxu0 0.0
        %1368 = vmatprep.subr.mxu0 0.0
        %1369 = vmatpush1.msra.mxu0 0.0
        %1370 = vmatprep.subr.mxu0 0.0
        %1371 = vmatpush1.msra.mxu0 0.0
        %1372 = vmatprep.subr.mxu0 0.0
        %1373 = vmatpush1.msra.mxu0 0.0
        %1374 = vmatprep.subr.mxu0 0.0
        %1375 = vmatpush1.msra.mxu0 0.0
        %1376 = vmatprep.subr.mxu0 0.0
        %1377 = vmatpush1.msra.mxu0 0.0
        %1378 = vmatprep.subr.mxu0 0.0
        %1379 = vmatpush1.msra.mxu0 0.0
        %1380 = vmatprep.subr.mxu0 0.0
        %1381 = vmatpush1.msra.mxu0 0.0
        %1382 = vmatprep.subr.mxu0 0.0
        %1383 = vmatpush1.msra.mxu0 0.0
        %1384 = vmatprep.subr.mxu0 0.0
        %1385 = vmatpush1.msra.mxu0 0.0
        %1386 = vmatprep.subr.mxu0 0.0
        %1387 = vmatpush1.msra.mxu0 0.0
        %1388 = vmatprep.subr.mxu0 0.0
        %1389 = vmatpush1.msra.mxu0 0.0
        %1390 = vmatprep.subr.mxu0 0.0
        %1391 = vmatpush1.msra.mxu0 0.0
        %1392 = vmatprep.subr.mxu0 0.0
        %1393 = vmatpush1.msra.mxu0 0.0
        %1394 = vmatprep.subr.mxu0 0.0
        %1395 = vmatpush1.msra.mxu0 0.0
        %1396 = vmatprep.subr.mxu0 0.0
        %1397 = vmatpush1.msra.mxu0 0.0
        %1398 = vmatprep.subr.mxu0 0.0
        %1399 = vmatpush1.msra.mxu0 0.0
        %1400 = vmatprep.subr.mxu0 0.0
        %1401 = vmatpush1.msra.mxu0 0.0
        %1402 = vmatprep.subr.mxu0 0.0
        %1403 = vmatpush1.msra.mxu0 0.0
        %1404 = vmatprep.subr.mxu0 0.0
        %1405 = vmatpush1.msra.mxu0 0.0
        %1406 = vmatprep.subr.mxu0 0.0
        %1407 = vmatpush1.msra.mxu0 0.0
        %1408 = vmatprep.subr.mxu0 0.0
        %1409 = vmatpush1.msra.mxu0 0.0
        %1410 = vmatprep.subr.mxu0 0.0
        %1411 = vmatpush1.msra.mxu0 0.0
        %1412 = vmatprep.mubr.f32.mxu0 0.0
        %1413 = vmatmul.mubr.f32.gmra.mrb[0].mxu0 %v1346
        %v1414 = vpop.f32.mrb[0].mxu0
        %v1415 = vadd.f32 0.0, %v1414
        %v1416 = vpop.f32.mrb[0].mxu0
        %1417 = vdwg.mxu0
        %1418 = vrot.lane.b32.xlu0 %v684, 104
        %v1419 = vpop.permute.xlu0 %1418
        %v1421 = vsel %vm436, %v1415, 0
        %v1423 = vsel %vm436, %v1419, 0
        %1425 = vmatprep.subr.mxu0 0.0
        %1426 = vmatpush1.xpose.msra.mxu0 %v1423
        %1427 = vmatprep.subr.mxu0 0.0
        %1428 = vmatpush1.xpose.msra.mxu0 0.0
        %1429 = vmatprep.subr.mxu0 0.0
        %1430 = vmatpush1.xpose.msra.mxu0 0.0
        %1431 = vmatprep.subr.mxu0 0.0
        %1432 = vmatpush1.xpose.msra.mxu0 0.0
        %1433 = vmatprep.subr.mxu0 0.0
        %1434 = vmatpush1.xpose.msra.mxu0 0.0
        %1435 = vmatprep.subr.mxu0 0.0
        %1436 = vmatpush1.xpose.msra.mxu0 0.0
        %1437 = vmatprep.subr.mxu0 0.0
        %1438 = vmatpush1.xpose.msra.mxu0 0.0
        %1439 = vmatprep.subr.mxu0 0.0
        %1440 = vmatpush1.xpose.msra.mxu0 0.0
        %1441 = vmatprep.subr.mxu0 0.0
        %1442 = vmatpush1.xpose.msra.mxu0 0.0
        %1443 = vmatprep.subr.mxu0 0.0
        %1444 = vmatpush1.xpose.msra.mxu0 0.0
        %1445 = vmatprep.subr.mxu0 0.0
        %1446 = vmatpush1.xpose.msra.mxu0 0.0
        %1447 = vmatprep.subr.mxu0 0.0
        %1448 = vmatpush1.xpose.msra.mxu0 0.0
        %1449 = vmatprep.subr.mxu0 0.0
        %1450 = vmatpush1.xpose.msra.mxu0 0.0
        %1451 = vmatprep.subr.mxu0 0.0
        %1452 = vmatpush1.xpose.msra.mxu0 0.0
        %1453 = vmatprep.subr.mxu0 0.0
        %1454 = vmatpush1.xpose.msra.mxu0 0.0
        %1455 = vmatprep.subr.mxu0 0.0
        %1456 = vmatpush1.xpose.msra.mxu0 0.0
        %1457 = vmatprep.subr.mxu0 0.0
        %1458 = vmatpush1.xpose.msra.mxu0 0.0
        %1459 = vmatprep.subr.mxu0 0.0
        %1460 = vmatpush1.xpose.msra.mxu0 0.0
        %1461 = vmatprep.subr.mxu0 0.0
        %1462 = vmatpush1.xpose.msra.mxu0 0.0
        %1463 = vmatprep.subr.mxu0 0.0
        %1464 = vmatpush1.xpose.msra.mxu0 0.0
        %1465 = vmatprep.subr.mxu0 0.0
        %1466 = vmatpush1.xpose.msra.mxu0 0.0
        %1467 = vmatprep.subr.mxu0 0.0
        %1468 = vmatpush1.xpose.msra.mxu0 0.0
        %1469 = vmatprep.subr.mxu0 0.0
        %1470 = vmatpush1.xpose.msra.mxu0 0.0
        %1471 = vmatprep.subr.mxu0 0.0
        %1472 = vmatpush1.xpose.msra.mxu0 0.0
        %1473 = vmatprep.subr.mxu0 0.0
        %1474 = vmatpush1.xpose.msra.mxu0 0.0
        %1475 = vmatprep.subr.mxu0 0.0
        %1476 = vmatpush1.xpose.msra.mxu0 0.0
        %1477 = vmatprep.subr.mxu0 0.0
        %1478 = vmatpush1.xpose.msra.mxu0 0.0
        %1479 = vmatprep.subr.mxu0 0.0
        %1480 = vmatpush1.xpose.msra.mxu0 0.0
        %1481 = vmatprep.subr.mxu0 0.0
        %1482 = vmatpush1.xpose.msra.mxu0 0.0
        %1483 = vmatprep.subr.mxu0 0.0
        %1484 = vmatpush1.xpose.msra.mxu0 0.0
        %1485 = vmatprep.subr.mxu0 0.0
        %1486 = vmatpush1.xpose.msra.mxu0 0.0
        %1487 = vmatprep.subr.mxu0 0.0
        %1488 = vmatpush1.xpose.msra.mxu0 0.0
        %1489 = vmatprep.mubr.f32.mxu0 0.0
        %1490 = vmatmul.mubr.f32.gmra.mrb[0].mxu0 %v1421
        %v1491 = vpop.f32.mrb[0].mxu0
        %v1492 = vadd.f32 0.0, %v1491
        %v1493 = vpop.f32.mrb[0].mxu0
        %1494 = vdwg.mxu0
        %v1495 = vadd.f32 %v1250, %v1492
        %v1496 = vmul.f32 %v1495, 0.17677669
        %v1497 = vtanh.pop %v1496
        %v1498 = vmul.f32 %v1497, 10.0
        %vm1499 = vcmp.gt.f32.partialorder %v416, 0.5
        %v1500 = vsel %vm1499, -1e+09, %v1498
        %v1501 = vsel %vm598, %v1500, -inf
        %1502 = vmax.xlane.f32.xlu0 %v1501
        %v1503 = vpop.xlane.xlu0 %1502
        %v1504 = vsel %vm420, %v1503, -inf
        %v1505 = vrot.slane %v1504, 4
        %v1506 = vmax.f32 %v1504, %v1505
        %v1507 = vrot.slane %v1506, 2
        %v1508 = vmax.f32 %v1506, %v1507
        %v1509 = vrot.slane %v1508, 1
        %v1510 = vmax.f32 %v1508, %v1509
        %v1511 = vsub.f32 %v1500, %v1510
        %v1512 = vmul.f32 %v1511, 1.442695
        %v1513 = vpow.pop %v1512
        %v1514 = vsel %vm598, %v1513, 0.0
        %1515 = vadd.xlane.f32.xlu0 %v1514
        %v1516 = vpop.xlane.xlu0 %1515
        %v1517 = vsel %vm420, %v1516, 0.0
        %v1518 = vrot.slane %v1517, 4
        %v1519 = vadd.f32 %v1517, %v1518
        %v1520 = vrot.slane %v1519, 2
        %v1521 = vadd.f32 %v1519, %v1520
        %v1522 = vrot.slane %v1521, 1
        %v1523 = vadd.f32 %v1521, %v1522
        %v1524 = vlog2.pop %v1523
        %v1525 = vmul.f32 %v1524, 0.6931472
        %v1526 = vsub.f32 %v1511, %v1525
        %v1527 = vsel %vm598, %v1526, -inf
        %1528 = vmax.xlane.f32.xlu0 %v1527
        %v1529 = vpop.xlane.xlu0 %1528
        %v1530 = vsel %vm420, %v1529, -inf
        %v1531 = vrot.slane %v1530, 4
        %v1532 = vmax.f32 %v1530, %v1531
        %v1533 = vrot.slane %v1532, 2
        %v1534 = vmax.f32 %v1532, %v1533
        %v1535 = vrot.slane %v1534, 1
        %v1536 = vmax.f32 %v1534, %v1535
        %vm1537 = vcmp.eq.f32.partialorder %v1526, %v1536
        %v1538 = vsel %vm1537, %v404, 24.0
        %v1539 = vsel %vm598, %v1538, inf
        %1540 = vmin.xlane.f32.xlu0 %v1539
        %v1541 = vpop.xlane.xlu0 %1540
        %v1542 = vsel %vm420, %v1541, inf
        %v1543 = vrot.slane %v1542, 4
        %v1544 = vmin.f32 %v1542, %v1543
        %v1545 = vrot.slane %v1544, 2
        %v1546 = vmin.f32 %v1544, %v1545
        %v1547 = vrot.slane %v1546, 1
        %v1548 = vmin.f32 %v1546, %v1547
        %vm1549 = vcmp.eq.f32.partialorder %v404, %v1548
        %v1550 = vsel %vm1549, 1, 0
        %v1551 = vcvt.s32.f32 %v1550
        %v1552 = vsel %vm598, %v1551, 0.0
        %1553 = vadd.xlane.f32.xlu0 %v1552
        %v1554 = vpop.xlane.xlu0 %1553
        %v1555 = vrot.slane %v1552, 4
        %v1556 = vadd.f32 %v1552, %v1555
        %v1557 = vrot.slane %v1556, 2
        %v1558 = vadd.f32 %v1556, %v1557
        %v1559 = vrot.slane %v1558, 1
        %v1560 = vadd.f32 %v1558, %v1559
        %v1561 = vmul.f32 %v1551, %v1526
        %v1562 = vsel %vm598, %v1561, 0.0
        %1563 = vadd.xlane.f32.xlu0 %v1562
        %v1564 = vpop.xlane.xlu0 %1563
        %v1565 = vsel %vm420, %v1564, 0.0
        %v1566 = vrot.slane %v1565, 4
        %v1567 = vadd.f32 %v1565, %v1566
        %v1568 = vrot.slane %v1567, 2
        %v1569 = vadd.f32 %v1567, %v1568
        %v1570 = vrot.slane %v1569, 1
        %v1571 = vadd.f32 %v1569, %v1570
        %v1572 = vadd.f32 %v419, %v1571
        %v1573 = vmul.f32 %v1554, %v415
        %v1574 = vsel %vm598, %v1573, 0.0
        %v1575 = vrot.slane %v1574, 4
        %v1576 = vadd.f32 %v1574, %v1575
        %v1577 = vrot.slane %v1576, 2
        %v1578 = vadd.f32 %v1576, %v1577
        %v1579 = vrot.slane %v1578, 1
        %v1580 = vadd.f32 %v1578, %v1579
        %v1581 = vsub.f32 %v1560, %v1580
        %v1582 = vmul.f32 %v1581, %v396
        %vm1583 = vcmask 58368
        %v1584 = vsel %vm1583, %v1582, 0.0
        %1585 = vadd.xlane.f32.xlu0 %v1584
        %v1586 = vpop.xlane.xlu0 %1585
        %v1587 = vmul.f32 %v1586, %v1586
        %vm1588 = vcmask 1041408
        %v1589 = vsel %vm1588, %v1587, 0.0
        %v1590 = vrot.slane %v1589, 4
        %v1591 = vadd.f32 %v1589, %v1590
        %v1592 = vrot.slane %v1591, 2
        %v1593 = vadd.f32 %v1591, %v1592
        %v1594 = vrot.slane %v1593, 1
        %v1595 = vadd.f32 %v1593, %v1594
        %v1596 = vrsqrt.pop %v1595
        %v1597 = vmul.f32 %v1595, %v1596
        %vm1598 = vcmp.eq.f32.partialorder %v1595, inf
        %v1599 = vsel %vm1598, %v1595, %v1597
        %vm1600 = vcmp.eq.f32.partialorder %v1595, 0.0
        %v1601 = vand.u32 %v1595, 2147483648
        %v1602 = vsel %vm1600, %v1601, %v1599
        %v1603 = vmul.f32 %v1554, %v1602
        %v1604 = vadd.f32 %v417, %v1603
        %v1605 = vmul.f32 %v1554, %v1560
        %v1606 = vsub.f32 1.0, %v1554
        %v1607 = vmul.f32 %v1606, %v415
        %v1608 = vadd.f32 %v1605, %v1607
        %v1609 = vmax.f32 %v416, %v1560
        %v1610 = vmul.f32 %v1608, %v399
        %v1611 = vsel %vm598, %v1610, 0.0
        %1612 = vadd.xlane.f32.xlu0 %v1611
        %v1613 = vpop.xlane.xlu0 %1612
        %v1614 = vstv %s410
        %vm1615 = vcmp.eq.s32.totalorder %v398, %v1614
        %v1616 = vsel %vm1615, 1, 0
        %v1617 = vcvt.s32.f32 %v1616
        %v1618 = vmul.f32 %v1613, %v1617
        %v1619 = vadd.f32 %v418, %v1618
      $region53: #{am_tsp_2d_limitveh_actor.3} parent=47 // loop_footer
        %s414 = sadd.s32 1, %s410
      $region54: #{am_tsp_2d_limitveh_actor.3} parent=47 // loop_footer_branch
        %409 = sbr.rel target = $region50
      $region55: #{am_tsp_2d_limitveh_actor.3} parent=47 // loop_exit
        _
      %v1620 = vcvt.f32.s32.to.zero.pseudo %v418
      %vm1621 = vcmask 67584
      %1622 = vst.msk [vmem:[%s390] sm:$0x7] %vm1621, %v1620
      %vm1623 = vcmask 0
      %1624 = vst.msk [vmem:[%s393] sm:$0x1] %vm1623, %v419
      %p1625 = scmp.lt.s32.totalorder %s22, 1
      %s1626 = scalar_select %p1625, %s22, 1
      %s1627 = smul.addr %s1626, 4
      %s1628 = scalar_lea.vmem %s8, %s1627
      %p1629 = scmp.lt.s32.totalorder %s22, 1
      %s1630 = scalar_select %p1629, %s22, 1
      %s1631 = scalar_lea.vmem %s9, %s1630
      // Predicated region
      $region56: #{am_tsp_2d_limitveh_actor.3} parent=47 // pred_check
        %p1632 = pneg %p217
      $region57: #{am_tsp_2d_limitveh_actor.3} parent=47 // pred_check_branch
        %1634 = sbr.rel (%p1632) target = $region59
      $region58: #{am_tsp_2d_limitveh_actor.3} parent=47 // pred_region
        _
      $region59: #{am_tsp_2d_limitveh_actor.3} parent=47 // pred_fallthru
        _
      // Predicated region
      $region60: #{am_tsp_2d_limitveh_actor.3} parent=47 // pred_check
        %p1635 = pneg %p243
      $region61: #{am_tsp_2d_limitveh_actor.3} parent=47 // pred_check_branch
        %1637 = sbr.rel (%p1635) target = $region63
      $region62: #{am_tsp_2d_limitveh_actor.3} parent=47 // pred_region
        _
      $region63: #{am_tsp_2d_limitveh_actor.3} parent=47 // pred_fallthru
        _
    $region48: #{am_tsp_2d_limitveh_actor.3} parent=5 // pred_fallthru
      _
    %p1638 = scmp.le.s32.totalorder 2, %s17
    // Predicated region
    $region64: #{am_tsp_2d_limitveh_actor.3} parent=5 // pred_check
      %p1639 = pneg %p1638
    $region65: #{am_tsp_2d_limitveh_actor.3} parent=5 // pred_check_branch
      %1641 = sbr.rel (%p1639) target = $region67
    $region66: #{am_tsp_2d_limitveh_actor.3} parent=5 // pred_region
      %s1642 = ssub.s32 %s17, 2
      // Predicated region
      $region68: #{am_tsp_2d_limitveh_actor.3} parent=66 // pred_check
        %p1643 = pneg %p223
      $region69: #{am_tsp_2d_limitveh_actor.3} parent=66 // pred_check_branch
        %1645 = sbr.rel (%p1643) target = $region71
      $region70: #{am_tsp_2d_limitveh_actor.3} parent=66 // pred_region
        %p1646 = scmp.lt.s32.totalorder %s23, 1
        %s1647 = scalar_select %p1646, %s23, 1
        %s1648 = smul.addr %s1647, 4
        %s1649 = scalar_lea.vmem %s8, %s1648
      $region71: #{am_tsp_2d_limitveh_actor.3} parent=66 // pred_fallthru
        _
      // Predicated region
      $region72: #{am_tsp_2d_limitveh_actor.3} parent=66 // pred_check
        %p1650 = pneg %p249
      $region73: #{am_tsp_2d_limitveh_actor.3} parent=66 // pred_check_branch
        %1652 = sbr.rel (%p1650) target = $region75
      $region74: #{am_tsp_2d_limitveh_actor.3} parent=66 // pred_region
        %p1653 = scmp.lt.s32.totalorder %s23, 1
        %s1654 = scalar_select %p1653, %s23, 1
        %s1655 = scalar_lea.vmem %s9, %s1654
      $region75: #{am_tsp_2d_limitveh_actor.3} parent=66 // pred_fallthru
        _
    $region67: #{am_tsp_2d_limitveh_actor.3} parent=5 // pred_fallthru
      _
  $region6: #{am_tsp_2d_limitveh_actor.3} parent=0 // loop_footer
    %s21 = sadd.s32 1, %s17
  $region7: #{am_tsp_2d_limitveh_actor.3} parent=0 // loop_footer_branch
    %16 = sbr.rel target = $region3
  $region8: #{am_tsp_2d_limitveh_actor.3} parent=0 // loop_exit
    _

</llo_original>
